<compile_context>
chip_gen: v6e
topology: v6e:2x2x1
jax: 0.10.0
libtpu: 0.0.40
codegen_flags: <defaults>
</compile_context>

<pallas_src>
import jax
import jax.numpy as jnp
from jax import lax
from jax.experimental import pallas as pl
from jax.experimental.pallas import tpu as pltpu

_LANES = 128
_NUM_TENSORS = 24


# --------------------------------------------------------------------------
# In-kernel helpers
# --------------------------------------------------------------------------
def _center_rownorm(x):
    """x - mean(x) (global mean), then L2-normalize each row (F.normalize, eps=1e-12)."""
    x = x - jnp.mean(x)
    ss = jnp.sum(x * x, axis=1, keepdims=True)
    inv = lax.rsqrt(jnp.maximum(ss, jnp.float32(1e-24)))  # == 1 / max(||row||, 1e-12)
    return x * inv


# --------------------------------------------------------------------------
# Fused loss kernel (single program, grid=(), everything VMEM-resident)
# --------------------------------------------------------------------------
def loss_kernel(shsp_ref, mlp_ref, v1_ref, v2_ref, v3_ref, kl_ref, temp_ref, out_ref):
    batch = mlp_ref.shape[1]
    n3 = 3 * batch

    # --- orthogonality between shared (slots 0..2) and specific (slots 3..5) ---
    orth_all = jnp.float32(0.0)
    for v in range(3):
        orth_all += jnp.mean(_center_rownorm(shsp_ref[v]) * _center_rownorm(shsp_ref[3 + v]))

    # --- contrastive NT-Xent on the three shared-MLP pairs (fused Gram) ---
    inv_t = 1.0 / temp_ref[0, 0]
    n = [_center_rownorm(mlp_ref[v]) for v in range(3)]
    z = jnp.concatenate(n, axis=0)                                   # (3B, D)
    # One MXU pass for all three pairs; temperature folded into the LHS operand.
    s = lax.dot_general(z * inv_t, z, (((1,), (1,)), ((), ())),
                        preferred_element_type=jnp.float32)          # (3B, 3B)

    # Masks / iotas built ONCE and reused by all pairs.
    r = lax.broadcasted_iota(jnp.int32, (n3, n3), 0)
    c = lax.broadcasted_iota(jnp.int32, (n3, n3), 1)
    s_nd = jnp.where(r == c, jnp.float32(-1e30), s)                  # drop self-similarity
    m = jnp.max(s_nd, axis=1, keepdims=True)                         # (3B, 1) row max
    # exp computed once; diagonal underflows to exactly 0.  (Shift uses the row max over
    # all non-diag columns; with unit-norm rows the spread is <= 2/T, safe for any sane T.)
    e = jnp.exp(s_nd - m)
    # Per-view column sums of e -> each pair's denominator = bs[a] + bs[b].
    bs = [jnp.sum(jnp.where((c >= v * batch) & (c < (v + 1) * batch), e, 0.0),
                  axis=1, keepdims=True) for v in range(3)]
    rr = lax.broadcasted_iota(jnp.int32, (n3, 1), 0)
    rmask = [(rr >= v * batch) & (rr < (v + 1) * batch) for v in range(3)]

    def pair_lse_sum(a, b):
        lse = jnp.log(bs[a] + bs[b]) + m                             # exact per-row LSE
        return jnp.sum(jnp.where(rmask[a] | rmask[b], lse, 0.0))

    lse_all = pair_lse_sum(0, 1) + pair_lse_sum(0, 2) + pair_lse_sum(1, 2)
    # Positives sim[i, partner(i)] = inv_t * <n_a_i, n_b_i>; each pair counts them twice.
    pos_all = inv_t * (jnp.sum(n[0] * n[1]) + jnp.sum(n[0] * n[2]) + jnp.sum(n[1] * n[2]))
    contrast_all = (lse_all - 2.0 * pos_all) / (2 * batch)

    # --- reconstruction: each view slab is [shared_rec, specific_rec, ori];
    #     ori's centered row-norm is computed once and reused for both terms. ---
    rec_all = jnp.float32(0.0)
    for vref in (v1_ref, v2_ref, v3_ref):
        n_ori = _center_rownorm(vref[2])
        d_sh = _center_rownorm(vref[0]) - n_ori
        d_sp = _center_rownorm(vref[1]) - n_ori
        rec_all += jnp.sqrt(jnp.sum(d_sh * d_sh)) + jnp.sqrt(jnp.sum(d_sp * d_sp))

    # --- KL on lane-dense slabs (mu = slot 0, sig = slot 1; zero padding adds 0) ---
    mu = kl_ref[0]
    sig = kl_ref[1]
    kl = -0.5 * jnp.sum(1.0 + sig - mu * mu - jnp.exp(sig))

    out_ref[0, 0] = orth_all + contrast_all + 0.7 * rec_all + kl
    out_ref[0, 1] = kl


# --------------------------------------------------------------------------
# Wrapper: pack 24 tiny tensors into 7 contiguous operands, one pallas_call
# --------------------------------------------------------------------------
def _pack_kl_slab(mus, sigs):
    """Flatten mu/sig to lane-dense (rows, 128) slabs; zero-pad (contributes 0 to KL)."""
    mu = jnp.concatenate([m.reshape(-1) for m in mus])
    sg = jnp.concatenate([s.reshape(-1) for s in sigs])
    n = mu.shape[0]
    rows = pl.cdiv(n, _LANES)
    pad = rows * _LANES - n
    mu = jnp.pad(mu, (0, pad))
    sg = jnp.pad(sg, (0, pad))
    return jnp.stack([mu, sg]).reshape(2, rows, _LANES)


@jax.jit
def _loss_core(tensors, temp):
    (sh1, sh2, sh3, sp1, sp2, sp3,
     sh1r, sh2r, sh3r, sp1r, sp2r, sp3r,
     o1, o2, o3, m1, m2, m3,
     mu1, sg1, mu2, sg2, mu3, sg3) = tensors

    shsp = jnp.stack([sh1, sh2, sh3, sp1, sp2, sp3])      # (6, B, L)
    mlp = jnp.stack([m1, m2, m3])                         # (3, B, M)
    view1 = jnp.stack([sh1r, sp1r, o1])                   # (3, B, V1)
    view2 = jnp.stack([sh2r, sp2r, o2])                   # (3, B, V2)
    view3 = jnp.stack([sh3r, sp3r, o3])                   # (3, B, V3)
    kl_slab = _pack_kl_slab((mu1, mu2, mu3), (sg1, sg2, sg3))   # (2, rows, 128)

    vmem = pl.BlockSpec(memory_space=pltpu.MemorySpace.VMEM)
    smem = pl.BlockSpec(memory_space=pltpu.MemorySpace.SMEM)
    out = pl.pallas_call(
        loss_kernel,
        out_shape=jax.ShapeDtypeStruct((1, 2), jnp.float32),
        in_specs=[vmem, vmem, vmem, vmem, vmem, vmem, smem],
        out_specs=smem,
    )(shsp, mlp, view1, view2, view3, kl_slab, temp)
    return out[0, 0], out[0, 1]


def shared_and_specific_loss(params):
    """params: the same 26-tuple as SharedAndSpecificLoss.forward
    (24 (batch, feature) tensors, temperature, batch_size). Returns (loss_total, KL)."""
    *tensors, temperature, batch_size = params
    assert len(tensors) == _NUM_TENSORS
    tensors = tuple(jnp.asarray(t, jnp.float32) for t in tensors)
    assert int(batch_size) == tensors[15].shape[0], "batch_size must equal shared*_mlp rows"
    temp = jnp.asarray(temperature, jnp.float32).reshape(1, 1)
    return _loss_core(tensors, temp)


# --------------------------------------------------------------------------
# Pure-JAX reference (mirrors the PyTorch module, for correctness check)
# --------------------------------------------------------------------------
def _reference_loss(tensors, temperature):
    (sh1, sh2, sh3, sp1, sp2, sp3,
     sh1r, sh2r, sh3r, sp1r, sp2r, sp3r,
     o1, o2, o3, m1, m2, m3,
     mu1, sg1, mu2, sg2, mu3, sg3) = tensors

    def cn(x):
        x = x - jnp.mean(x)
        return x / jnp.maximum(jnp.linalg.norm(x, axis=1, keepdims=True), 1e-12)

    def orth(a, b):
        return jnp.mean(cn(a) * cn(b))

    def rec(r, o):
        return jnp.linalg.norm(cn(r) - cn(o))  # Frobenius

    def pair(a, b):
        bsz = a.shape[0]
        z = jnp.concatenate([cn(a), cn(b)], axis=0)
        sim = z @ z.T / temperature
        n = 2 * bsz
        sim_m = jnp.where(jnp.eye(n, dtype=bool), -jnp.inf, sim)
        lse = jax.scipy.special.logsumexp(sim_m, axis=1)
        pos = jnp.concatenate([jnp.diagonal(sim, offset=bsz),
                               jnp.diagonal(sim, offset=-bsz)])
        return jnp.sum(lse - pos) / n

    def kl(mu, sg):
        return -0.5 * jnp.sum(1.0 + sg - mu ** 2 - jnp.exp(sg))

    orth_all = orth(sh1, sp1) + orth(sh2, sp2) + orth(sh3, sp3)
    contrast_all = pair(m1, m2) + pair(m1, m3) + pair(m2, m3)
    rec_all = (rec(sh1r, o1) + rec(sp1r, o1) + rec(sh2r, o2) + rec(sp2r, o2)
               + rec(sh3r, o3) + rec(sp3r, o3))
    kl_all = kl(mu1, sg1) + kl(mu2, sg2) + kl(mu3, sg3)
    return orth_all + contrast_all + 0.7 * rec_all + kl_all, kl_all


# --------------------------------------------------------------------------
# Main
# --------------------------------------------------------------------------
if __name__ == "__main__":
    B = 8                 # batch_size (matches InstanceLoss batch_size argument)
    latent_dim = 16       # shared/specific embedding and mu/sigma width
    mlp_dim = 8           # shared-branch MLP head width
    view_size = [32, 48, 64]
    temperature = 0.5

    keys = iter(jax.random.split(jax.random.PRNGKey(0), 24))

    def nrm(shape, scale=1.0):
        return scale * jax.random.normal(next(keys), shape, jnp.float32)

    def uni(shape):
        return jax.random.uniform(next(keys), shape, jnp.float32)

    shared_out = [nrm((B, latent_dim)) for _ in range(3)]
    specific_out = [nrm((B, latent_dim)) for _ in range(3)]
    shared_rec = [uni((B, view_size[i])) for i in range(3)]     # sigmoid-range recs
    specific_rec = [uni((B, view_size[i])) for i in range(3)]
    ori = [nrm((B, view_size[i])) for i in range(3)]
    shared_mlp = [nrm((B, mlp_dim)) for _ in range(3)]
    mu = [nrm((B, latent_dim)) for _ in range(3)]
    sig = [nrm((B, latent_dim), 0.5) for _ in range(3)]

    params = (shared_out[0], shared_out[1], shared_out[2],
              specific_out[0], specific_out[1], specific_out[2],
              shared_rec[0], shared_rec[1], shared_rec[2],
              specific_rec[0], specific_rec[1], specific_rec[2],
              ori[0], ori[1], ori[2],
              shared_mlp[0], shared_mlp[1], shared_mlp[2],
              mu[0], sig[0], mu[1], sig[1], mu[2], sig[2],
              temperature, B)

    loss_total, kl = shared_and_specific_loss(params)
    jax.block_until_ready((loss_total, kl))

    ref_total, ref_kl = _reference_loss(
        tuple(jnp.asarray(t, jnp.float32) for t in params[:24]), temperature)

    assert bool(jnp.isfinite(loss_total)) and bool(jnp.isfinite(kl))
    assert bool(jnp.allclose(loss_total, ref_total, rtol=1e-2, atol=1e-2)), (loss_total, ref_total)
    assert bool(jnp.allclose(kl, ref_kl, rtol=1e-2, atol=1e-2)), (kl, ref_kl)

    print("KERNEL_OK")
</pallas_src>

<mosaic_0001>
module attributes {stable_mosaic.version = 11 : i64} {
  func.func @loss_kernel(%arg0: memref<6x8x16xf32, #tpu.memory_space<vmem>>, %arg1: memref<3x8x8xf32, #tpu.memory_space<vmem>>, %arg2: memref<3x8x32xf32, #tpu.memory_space<vmem>>, %arg3: memref<3x8x48xf32, #tpu.memory_space<vmem>>, %arg4: memref<3x8x64xf32, #tpu.memory_space<vmem>>, %arg5: memref<2x3x128xf32, #tpu.memory_space<vmem>>, %arg6: memref<1x1xf32, #tpu.memory_space<smem>>, %arg7: memref<1x2xf32, #tpu.memory_space<smem>>) attributes {dimension_semantics = [], scalar_prefetch = 0 : i64, scratch_operands = 0 : i64, tpu.core_type = #tpu.core_type<tc>} {
    %c0 = arith.constant 0 : index
    %c0_0 = arith.constant 0 : index
    %c0_1 = arith.constant 0 : index
    %0 = vector.load %arg0[%c0, %c0_0, %c0_1] : memref<6x8x16xf32, #tpu.memory_space<vmem>>, vector<1x8x16xf32>
    %1 = vector.shape_cast %0 : vector<1x8x16xf32> to vector<8x16xf32>
    %2 = vector.shape_cast %1 : vector<8x16xf32> to vector<1x8x16xf32>
    %cst = arith.constant dense<0.000000e+00> : vector<1xf32>
    %3 = vector.multi_reduction <add>, %2, %cst [1, 2] : vector<1x8x16xf32> to vector<1xf32>
    %4 = vector.shape_cast %3 : vector<1xf32> to vector<1x1x1xf32>
    %5 = vector.extract %4[0, 0, 0] : f32 from vector<1x1x1xf32>
    %cst_2 = arith.constant 1.280000e+02 : f32
    %6 = arith.divf %5, %cst_2 : f32
    %7 = vector.broadcast %6 : f32 to vector<8x16xf32>
    %8 = arith.subf %1, %7 : vector<8x16xf32>
    %9 = arith.mulf %8, %8 : vector<8x16xf32>
    %cst_3 = arith.constant dense<0.000000e+00> : vector<8xf32>
    %10 = vector.multi_reduction <add>, %9, %cst_3 [1] : vector<8x16xf32> to vector<8xf32>
    %11 = vector.shape_cast %10 : vector<8xf32> to vector<8x1xf32>
    %cst_4 = arith.constant 1.000000e-24 : f32
    %12 = vector.broadcast %cst_4 : f32 to vector<8x1xf32>
    %13 = arith.maximumf %11, %12 : vector<8x1xf32>
    %14 = math.rsqrt %13 : vector<8x1xf32>
    %15 = vector.broadcast %14 : vector<8x1xf32> to vector<8x16xf32>
    %16 = arith.mulf %8, %15 : vector<8x16xf32>
    %c3 = arith.constant 3 : index
    %c0_5 = arith.constant 0 : index
    %c0_6 = arith.constant 0 : index
    %17 = vector.load %arg0[%c3, %c0_5, %c0_6] : memref<6x8x16xf32, #tpu.memory_space<vmem>>, vector<1x8x16xf32>
    %18 = vector.shape_cast %17 : vector<1x8x16xf32> to vector<8x16xf32>
    %19 = vector.shape_cast %18 : vector<8x16xf32> to vector<1x8x16xf32>
    %cst_7 = arith.constant dense<0.000000e+00> : vector<1xf32>
    %20 = vector.multi_reduction <add>, %19, %cst_7 [1, 2] : vector<1x8x16xf32> to vector<1xf32>
    %21 = vector.shape_cast %20 : vector<1xf32> to vector<1x1x1xf32>
    %22 = vector.extract %21[0, 0, 0] : f32 from vector<1x1x1xf32>
    %cst_8 = arith.constant 1.280000e+02 : f32
    %23 = arith.divf %22, %cst_8 : f32
    %24 = vector.broadcast %23 : f32 to vector<8x16xf32>
    %25 = arith.subf %18, %24 : vector<8x16xf32>
    %26 = arith.mulf %25, %25 : vector<8x16xf32>
    %cst_9 = arith.constant dense<0.000000e+00> : vector<8xf32>
    %27 = vector.multi_reduction <add>, %26, %cst_9 [1] : vector<8x16xf32> to vector<8xf32>
    %28 = vector.shape_cast %27 : vector<8xf32> to vector<8x1xf32>
    %cst_10 = arith.constant 1.000000e-24 : f32
    %29 = vector.broadcast %cst_10 : f32 to vector<8x1xf32>
    %30 = arith.maximumf %28, %29 : vector<8x1xf32>
    %31 = math.rsqrt %30 : vector<8x1xf32>
    %32 = vector.broadcast %31 : vector<8x1xf32> to vector<8x16xf32>
    %33 = arith.mulf %25, %32 : vector<8x16xf32>
    %34 = arith.mulf %16, %33 : vector<8x16xf32>
    %35 = vector.shape_cast %34 : vector<8x16xf32> to vector<1x8x16xf32>
    %cst_11 = arith.constant dense<0.000000e+00> : vector<1xf32>
    %36 = vector.multi_reduction <add>, %35, %cst_11 [1, 2] : vector<1x8x16xf32> to vector<1xf32>
    %37 = vector.shape_cast %36 : vector<1xf32> to vector<1x1x1xf32>
    %38 = vector.extract %37[0, 0, 0] : f32 from vector<1x1x1xf32>
    %cst_12 = arith.constant 1.280000e+02 : f32
    %39 = arith.divf %38, %cst_12 : f32
    %cst_13 = arith.constant 0.000000e+00 : f32
    %40 = arith.addf %cst_13, %39 : f32
    %c1 = arith.constant 1 : index
    %c0_14 = arith.constant 0 : index
    %c0_15 = arith.constant 0 : index
    %41 = vector.load %arg0[%c1, %c0_14, %c0_15] : memref<6x8x16xf32, #tpu.memory_space<vmem>>, vector<1x8x16xf32>
    %42 = vector.shape_cast %41 : vector<1x8x16xf32> to vector<8x16xf32>
    %43 = vector.shape_cast %42 : vector<8x16xf32> to vector<1x8x16xf32>
    %cst_16 = arith.constant dense<0.000000e+00> : vector<1xf32>
    %44 = vector.multi_reduction <add>, %43, %cst_16 [1, 2] : vector<1x8x16xf32> to vector<1xf32>
    %45 = vector.shape_cast %44 : vector<1xf32> to vector<1x1x1xf32>
    %46 = vector.extract %45[0, 0, 0] : f32 from vector<1x1x1xf32>
    %cst_17 = arith.constant 1.280000e+02 : f32
    %47 = arith.divf %46, %cst_17 : f32
    %48 = vector.broadcast %47 : f32 to vector<8x16xf32>
    %49 = arith.subf %42, %48 : vector<8x16xf32>
    %50 = arith.mulf %49, %49 : vector<8x16xf32>
    %cst_18 = arith.constant dense<0.000000e+00> : vector<8xf32>
    %51 = vector.multi_reduction <add>, %50, %cst_18 [1] : vector<8x16xf32> to vector<8xf32>
    %52 = vector.shape_cast %51 : vector<8xf32> to vector<8x1xf32>
    %cst_19 = arith.constant 1.000000e-24 : f32
    %53 = vector.broadcast %cst_19 : f32 to vector<8x1xf32>
    %54 = arith.maximumf %52, %53 : vector<8x1xf32>
    %55 = math.rsqrt %54 : vector<8x1xf32>
    %56 = vector.broadcast %55 : vector<8x1xf32> to vector<8x16xf32>
    %57 = arith.mulf %49, %56 : vector<8x16xf32>
    %c4 = arith.constant 4 : index
    %c0_20 = arith.constant 0 : index
    %c0_21 = arith.constant 0 : index
    %58 = vector.load %arg0[%c4, %c0_20, %c0_21] : memref<6x8x16xf32, #tpu.memory_space<vmem>>, vector<1x8x16xf32>
    %59 = vector.shape_cast %58 : vector<1x8x16xf32> to vector<8x16xf32>
    %60 = vector.shape_cast %59 : vector<8x16xf32> to vector<1x8x16xf32>
    %cst_22 = arith.constant dense<0.000000e+00> : vector<1xf32>
    %61 = vector.multi_reduction <add>, %60, %cst_22 [1, 2] : vector<1x8x16xf32> to vector<1xf32>
    %62 = vector.shape_cast %61 : vector<1xf32> to vector<1x1x1xf32>
    %63 = vector.extract %62[0, 0, 0] : f32 from vector<1x1x1xf32>
    %cst_23 = arith.constant 1.280000e+02 : f32
    %64 = arith.divf %63, %cst_23 : f32
    %65 = vector.broadcast %64 : f32 to vector<8x16xf32>
    %66 = arith.subf %59, %65 : vector<8x16xf32>
    %67 = arith.mulf %66, %66 : vector<8x16xf32>
    %cst_24 = arith.constant dense<0.000000e+00> : vector<8xf32>
    %68 = vector.multi_reduction <add>, %67, %cst_24 [1] : vector<8x16xf32> to vector<8xf32>
    %69 = vector.shape_cast %68 : vector<8xf32> to vector<8x1xf32>
    %cst_25 = arith.constant 1.000000e-24 : f32
    %70 = vector.broadcast %cst_25 : f32 to vector<8x1xf32>
    %71 = arith.maximumf %69, %70 : vector<8x1xf32>
    %72 = math.rsqrt %71 : vector<8x1xf32>
    %73 = vector.broadcast %72 : vector<8x1xf32> to vector<8x16xf32>
    %74 = arith.mulf %66, %73 : vector<8x16xf32>
    %75 = arith.mulf %57, %74 : vector<8x16xf32>
    %76 = vector.shape_cast %75 : vector<8x16xf32> to vector<1x8x16xf32>
    %cst_26 = arith.constant dense<0.000000e+00> : vector<1xf32>
    %77 = vector.multi_reduction <add>, %76, %cst_26 [1, 2] : vector<1x8x16xf32> to vector<1xf32>
    %78 = vector.shape_cast %77 : vector<1xf32> to vector<1x1x1xf32>
    %79 = vector.extract %78[0, 0, 0] : f32 from vector<1x1x1xf32>
    %cst_27 = arith.constant 1.280000e+02 : f32
    %80 = arith.divf %79, %cst_27 : f32
    %81 = arith.addf %40, %80 : f32
    %c2 = arith.constant 2 : index
    %c0_28 = arith.constant 0 : index
    %c0_29 = arith.constant 0 : index
    %82 = vector.load %arg0[%c2, %c0_28, %c0_29] : memref<6x8x16xf32, #tpu.memory_space<vmem>>, vector<1x8x16xf32>
    %83 = vector.shape_cast %82 : vector<1x8x16xf32> to vector<8x16xf32>
    %84 = vector.shape_cast %83 : vector<8x16xf32> to vector<1x8x16xf32>
    %cst_30 = arith.constant dense<0.000000e+00> : vector<1xf32>
    %85 = vector.multi_reduction <add>, %84, %cst_30 [1, 2] : vector<1x8x16xf32> to vector<1xf32>
    %86 = vector.shape_cast %85 : vector<1xf32> to vector<1x1x1xf32>
    %87 = vector.extract %86[0, 0, 0] : f32 from vector<1x1x1xf32>
    %cst_31 = arith.constant 1.280000e+02 : f32
    %88 = arith.divf %87, %cst_31 : f32
    %89 = vector.broadcast %88 : f32 to vector<8x16xf32>
    %90 = arith.subf %83, %89 : vector<8x16xf32>
    %91 = arith.mulf %90, %90 : vector<8x16xf32>
    %cst_32 = arith.constant dense<0.000000e+00> : vector<8xf32>
    %92 = vector.multi_reduction <add>, %91, %cst_32 [1] : vector<8x16xf32> to vector<8xf32>
    %93 = vector.shape_cast %92 : vector<8xf32> to vector<8x1xf32>
    %cst_33 = arith.constant 1.000000e-24 : f32
    %94 = vector.broadcast %cst_33 : f32 to vector<8x1xf32>
    %95 = arith.maximumf %93, %94 : vector<8x1xf32>
    %96 = math.rsqrt %95 : vector<8x1xf32>
    %97 = vector.broadcast %96 : vector<8x1xf32> to vector<8x16xf32>
    %98 = arith.mulf %90, %97 : vector<8x16xf32>
    %c5 = arith.constant 5 : index
    %c0_34 = arith.constant 0 : index
    %c0_35 = arith.constant 0 : index
    %99 = vector.load %arg0[%c5, %c0_34, %c0_35] : memref<6x8x16xf32, #tpu.memory_space<vmem>>, vector<1x8x16xf32>
    %100 = vector.shape_cast %99 : vector<1x8x16xf32> to vector<8x16xf32>
    %101 = vector.shape_cast %100 : vector<8x16xf32> to vector<1x8x16xf32>
    %cst_36 = arith.constant dense<0.000000e+00> : vector<1xf32>
    %102 = vector.multi_reduction <add>, %101, %cst_36 [1, 2] : vector<1x8x16xf32> to vector<1xf32>
    %103 = vector.shape_cast %102 : vector<1xf32> to vector<1x1x1xf32>
    %104 = vector.extract %103[0, 0, 0] : f32 from vector<1x1x1xf32>
    %cst_37 = arith.constant 1.280000e+02 : f32
    %105 = arith.divf %104, %cst_37 : f32
    %106 = vector.broadcast %105 : f32 to vector<8x16xf32>
    %107 = arith.subf %100, %106 : vector<8x16xf32>
    %108 = arith.mulf %107, %107 : vector<8x16xf32>
    %cst_38 = arith.constant dense<0.000000e+00> : vector<8xf32>
    %109 = vector.multi_reduction <add>, %108, %cst_38 [1] : vector<8x16xf32> to vector<8xf32>
    %110 = vector.shape_cast %109 : vector<8xf32> to vector<8x1xf32>
    %cst_39 = arith.constant 1.000000e-24 : f32
    %111 = vector.broadcast %cst_39 : f32 to vector<8x1xf32>
    %112 = arith.maximumf %110, %111 : vector<8x1xf32>
    %113 = math.rsqrt %112 : vector<8x1xf32>
    %114 = vector.broadcast %113 : vector<8x1xf32> to vector<8x16xf32>
    %115 = arith.mulf %107, %114 : vector<8x16xf32>
    %116 = arith.mulf %98, %115 : vector<8x16xf32>
    %117 = vector.shape_cast %116 : vector<8x16xf32> to vector<1x8x16xf32>
    %cst_40 = arith.constant dense<0.000000e+00> : vector<1xf32>
    %118 = vector.multi_reduction <add>, %117, %cst_40 [1, 2] : vector<1x8x16xf32> to vector<1xf32>
    %119 = vector.shape_cast %118 : vector<1xf32> to vector<1x1x1xf32>
    %120 = vector.extract %119[0, 0, 0] : f32 from vector<1x1x1xf32>
    %cst_41 = arith.constant 1.280000e+02 : f32
    %121 = arith.divf %120, %cst_41 : f32
    %122 = arith.addf %81, %121 : f32
    %c0_42 = arith.constant 0 : index
    %c0_43 = arith.constant 0 : index
    %123 = memref.load %arg6[%c0_42, %c0_43] : memref<1x1xf32, #tpu.memory_space<smem>>
    %cst_44 = arith.constant 1.000000e+00 : f32
    %124 = arith.divf %cst_44, %123 : f32
    %c0_45 = arith.constant 0 : index
    %c0_46 = arith.constant 0 : index
    %c0_47 = arith.constant 0 : index
    %125 = vector.load %arg1[%c0_45, %c0_46, %c0_47] : memref<3x8x8xf32, #tpu.memory_space<vmem>>, vector<1x8x8xf32>
    %126 = vector.shape_cast %125 : vector<1x8x8xf32> to vector<8x8xf32>
    %127 = vector.shape_cast %126 : vector<8x8xf32> to vector<1x8x8xf32>
    %cst_48 = arith.constant dense<0.000000e+00> : vector<1xf32>
    %128 = vector.multi_reduction <add>, %127, %cst_48 [1, 2] : vector<1x8x8xf32> to vector<1xf32>
    %129 = vector.shape_cast %128 : vector<1xf32> to vector<1x1x1xf32>
    %130 = vector.extract %129[0, 0, 0] : f32 from vector<1x1x1xf32>
    %cst_49 = arith.constant 6.400000e+01 : f32
    %131 = arith.divf %130, %cst_49 : f32
    %132 = vector.broadcast %131 : f32 to vector<8x8xf32>
    %133 = arith.subf %126, %132 : vector<8x8xf32>
    %134 = arith.mulf %133, %133 : vector<8x8xf32>
    %cst_50 = arith.constant dense<0.000000e+00> : vector<8xf32>
    %135 = vector.multi_reduction <add>, %134, %cst_50 [1] : vector<8x8xf32> to vector<8xf32>
    %136 = vector.shape_cast %135 : vector<8xf32> to vector<8x1xf32>
    %cst_51 = arith.constant 1.000000e-24 : f32
    %137 = vector.broadcast %cst_51 : f32 to vector<8x1xf32>
    %138 = arith.maximumf %136, %137 : vector<8x1xf32>
    %139 = math.rsqrt %138 : vector<8x1xf32>
    %140 = vector.broadcast %139 : vector<8x1xf32> to vector<8x8xf32>
    %141 = arith.mulf %133, %140 : vector<8x8xf32>
    %c1_52 = arith.constant 1 : index
    %c0_53 = arith.constant 0 : index
    %c0_54 = arith.constant 0 : index
    %142 = vector.load %arg1[%c1_52, %c0_53, %c0_54] : memref<3x8x8xf32, #tpu.memory_space<vmem>>, vector<1x8x8xf32>
    %143 = vector.shape_cast %142 : vector<1x8x8xf32> to vector<8x8xf32>
    %144 = vector.shape_cast %143 : vector<8x8xf32> to vector<1x8x8xf32>
    %cst_55 = arith.constant dense<0.000000e+00> : vector<1xf32>
    %145 = vector.multi_reduction <add>, %144, %cst_55 [1, 2] : vector<1x8x8xf32> to vector<1xf32>
    %146 = vector.shape_cast %145 : vector<1xf32> to vector<1x1x1xf32>
    %147 = vector.extract %146[0, 0, 0] : f32 from vector<1x1x1xf32>
    %cst_56 = arith.constant 6.400000e+01 : f32
    %148 = arith.divf %147, %cst_56 : f32
    %149 = vector.broadcast %148 : f32 to vector<8x8xf32>
    %150 = arith.subf %143, %149 : vector<8x8xf32>
    %151 = arith.mulf %150, %150 : vector<8x8xf32>
    %cst_57 = arith.constant dense<0.000000e+00> : vector<8xf32>
    %152 = vector.multi_reduction <add>, %151, %cst_57 [1] : vector<8x8xf32> to vector<8xf32>
    %153 = vector.shape_cast %152 : vector<8xf32> to vector<8x1xf32>
    %cst_58 = arith.constant 1.000000e-24 : f32
    %154 = vector.broadcast %cst_58 : f32 to vector<8x1xf32>
    %155 = arith.maximumf %153, %154 : vector<8x1xf32>
    %156 = math.rsqrt %155 : vector<8x1xf32>
    %157 = vector.broadcast %156 : vector<8x1xf32> to vector<8x8xf32>
    %158 = arith.mulf %150, %157 : vector<8x8xf32>
    %c2_59 = arith.constant 2 : index
    %c0_60 = arith.constant 0 : index
    %c0_61 = arith.constant 0 : index
    %159 = vector.load %arg1[%c2_59, %c0_60, %c0_61] : memref<3x8x8xf32, #tpu.memory_space<vmem>>, vector<1x8x8xf32>
    %160 = vector.shape_cast %159 : vector<1x8x8xf32> to vector<8x8xf32>
    %161 = vector.shape_cast %160 : vector<8x8xf32> to vector<1x8x8xf32>
    %cst_62 = arith.constant dense<0.000000e+00> : vector<1xf32>
    %162 = vector.multi_reduction <add>, %161, %cst_62 [1, 2] : vector<1x8x8xf32> to vector<1xf32>
    %163 = vector.shape_cast %162 : vector<1xf32> to vector<1x1x1xf32>
    %164 = vector.extract %163[0, 0, 0] : f32 from vector<1x1x1xf32>
    %cst_63 = arith.constant 6.400000e+01 : f32
    %165 = arith.divf %164, %cst_63 : f32
    %166 = vector.broadcast %165 : f32 to vector<8x8xf32>
    %167 = arith.subf %160, %166 : vector<8x8xf32>
    %168 = arith.mulf %167, %167 : vector<8x8xf32>
    %cst_64 = arith.constant dense<0.000000e+00> : vector<8xf32>
    %169 = vector.multi_reduction <add>, %168, %cst_64 [1] : vector<8x8xf32> to vector<8xf32>
    %170 = vector.shape_cast %169 : vector<8xf32> to vector<8x1xf32>
    %cst_65 = arith.constant 1.000000e-24 : f32
    %171 = vector.broadcast %cst_65 : f32 to vector<8x1xf32>
    %172 = arith.maximumf %170, %171 : vector<8x1xf32>
    %173 = math.rsqrt %172 : vector<8x1xf32>
    %174 = vector.broadcast %173 : vector<8x1xf32> to vector<8x8xf32>
    %175 = arith.mulf %167, %174 : vector<8x8xf32>
    %176 = tpu.concatenate %141, %158, %175 in 0 : vector<8x8xf32>, vector<8x8xf32>, vector<8x8xf32> -> vector<24x8xf32>
    %177 = vector.broadcast %124 : f32 to vector<24x8xf32>
    %178 = arith.mulf %176, %177 : vector<24x8xf32>
    %cst_66 = arith.constant dense<0.000000e+00> : vector<24x24xf32>
    %179 = tpu.matmul %178, %176, %cst_66 {dimension_numbers = #tpu.dot_dimension_numbers<[1], [1], [0], [0], [0, 0, 1, 0], [], []>} : vector<24x8xf32>, vector<24x8xf32>, vector<24x24xf32> -> vector<24x24xf32>
    %180 = tpu.iota {dimensions = array<i32: 0>} : vector<24x24xi32>
    %181 = tpu.iota {dimensions = array<i32: 1>} : vector<24x24xi32>
    %182 = arith.cmpi eq, %180, %181 : vector<24x24xi32>
    %cst_67 = arith.constant -1.000000e+30 : f32
    %183 = vector.broadcast %cst_67 : f32 to vector<24x24xf32>
    %184 = arith.select %182, %183, %179 : vector<24x24xi1>, vector<24x24xf32>
    %cst_68 = arith.constant dense<0xFF800000> : vector<24xf32>
    %185 = vector.multi_reduction <maximumf>, %184, %cst_68 [1] : vector<24x24xf32> to vector<24xf32>
    %186 = vector.shape_cast %185 : vector<24xf32> to vector<24x1xf32>
    %187 = vector.broadcast %186 : vector<24x1xf32> to vector<24x24xf32>
    %188 = arith.subf %184, %187 : vector<24x24xf32>
    %189 = math.exp %188 : vector<24x24xf32>
    %c0_i32 = arith.constant 0 : i32
    %190 = vector.broadcast %c0_i32 : i32 to vector<24x24xi32>
    %191 = arith.cmpi sge, %181, %190 : vector<24x24xi32>
    %c8_i32 = arith.constant 8 : i32
    %192 = vector.broadcast %c8_i32 : i32 to vector<24x24xi32>
    %193 = arith.cmpi slt, %181, %192 : vector<24x24xi32>
    %194 = arith.andi %191, %193 : vector<24x24xi1>
    %cst_69 = arith.constant 0.000000e+00 : f32
    %195 = vector.broadcast %cst_69 : f32 to vector<24x24xf32>
    %196 = arith.select %194, %189, %195 : vector<24x24xi1>, vector<24x24xf32>
    %cst_70 = arith.constant dense<0.000000e+00> : vector<24xf32>
    %197 = vector.multi_reduction <add>, %196, %cst_70 [1] : vector<24x24xf32> to vector<24xf32>
    %198 = vector.shape_cast %197 : vector<24xf32> to vector<24x1xf32>
    %c8_i32_71 = arith.constant 8 : i32
    %199 = vector.broadcast %c8_i32_71 : i32 to vector<24x24xi32>
    %200 = arith.cmpi sge, %181, %199 : vector<24x24xi32>
    %c16_i32 = arith.constant 16 : i32
    %201 = vector.broadcast %c16_i32 : i32 to vector<24x24xi32>
    %202 = arith.cmpi slt, %181, %201 : vector<24x24xi32>
    %203 = arith.andi %200, %202 : vector<24x24xi1>
    %cst_72 = arith.constant 0.000000e+00 : f32
    %204 = vector.broadcast %cst_72 : f32 to vector<24x24xf32>
    %205 = arith.select %203, %189, %204 : vector<24x24xi1>, vector<24x24xf32>
    %cst_73 = arith.constant dense<0.000000e+00> : vector<24xf32>
    %206 = vector.multi_reduction <add>, %205, %cst_73 [1] : vector<24x24xf32> to vector<24xf32>
    %207 = vector.shape_cast %206 : vector<24xf32> to vector<24x1xf32>
    %c16_i32_74 = arith.constant 16 : i32
    %208 = vector.broadcast %c16_i32_74 : i32 to vector<24x24xi32>
    %209 = arith.cmpi sge, %181, %208 : vector<24x24xi32>
    %c24_i32 = arith.constant 24 : i32
    %210 = vector.broadcast %c24_i32 : i32 to vector<24x24xi32>
    %211 = arith.cmpi slt, %181, %210 : vector<24x24xi32>
    %212 = arith.andi %209, %211 : vector<24x24xi1>
    %cst_75 = arith.constant 0.000000e+00 : f32
    %213 = vector.broadcast %cst_75 : f32 to vector<24x24xf32>
    %214 = arith.select %212, %189, %213 : vector<24x24xi1>, vector<24x24xf32>
    %cst_76 = arith.constant dense<0.000000e+00> : vector<24xf32>
    %215 = vector.multi_reduction <add>, %214, %cst_76 [1] : vector<24x24xf32> to vector<24xf32>
    %216 = vector.shape_cast %215 : vector<24xf32> to vector<24x1xf32>
    %217 = tpu.iota {dimensions = array<i32: 0>} : vector<24x1xi32>
    %c0_i32_77 = arith.constant 0 : i32
    %218 = vector.broadcast %c0_i32_77 : i32 to vector<24x1xi32>
    %219 = arith.cmpi sge, %217, %218 : vector<24x1xi32>
    %c8_i32_78 = arith.constant 8 : i32
    %220 = vector.broadcast %c8_i32_78 : i32 to vector<24x1xi32>
    %221 = arith.cmpi slt, %217, %220 : vector<24x1xi32>
    %222 = arith.andi %219, %221 : vector<24x1xi1>
    %c8_i32_79 = arith.constant 8 : i32
    %223 = vector.broadcast %c8_i32_79 : i32 to vector<24x1xi32>
    %224 = arith.cmpi sge, %217, %223 : vector<24x1xi32>
    %c16_i32_80 = arith.constant 16 : i32
    %225 = vector.broadcast %c16_i32_80 : i32 to vector<24x1xi32>
    %226 = arith.cmpi slt, %217, %225 : vector<24x1xi32>
    %227 = arith.andi %224, %226 : vector<24x1xi1>
    %c16_i32_81 = arith.constant 16 : i32
    %228 = vector.broadcast %c16_i32_81 : i32 to vector<24x1xi32>
    %229 = arith.cmpi sge, %217, %228 : vector<24x1xi32>
    %c24_i32_82 = arith.constant 24 : i32
    %230 = vector.broadcast %c24_i32_82 : i32 to vector<24x1xi32>
    %231 = arith.cmpi slt, %217, %230 : vector<24x1xi32>
    %232 = arith.andi %229, %231 : vector<24x1xi1>
    %233 = arith.addf %198, %207 : vector<24x1xf32>
    %234 = math.log %233 : vector<24x1xf32>
    %235 = arith.addf %234, %186 : vector<24x1xf32>
    %236 = arith.ori %222, %227 : vector<24x1xi1>
    %cst_83 = arith.constant 0.000000e+00 : f32
    %237 = vector.broadcast %cst_83 : f32 to vector<24x1xf32>
    %238 = arith.select %236, %235, %237 : vector<24x1xi1>, vector<24x1xf32>
    %239 = vector.shape_cast %238 : vector<24x1xf32> to vector<1x24x1xf32>
    %cst_84 = arith.constant dense<0.000000e+00> : vector<1xf32>
    %240 = vector.multi_reduction <add>, %239, %cst_84 [1, 2] : vector<1x24x1xf32> to vector<1xf32>
    %241 = vector.shape_cast %240 : vector<1xf32> to vector<1x1x1xf32>
    %242 = vector.extract %241[0, 0, 0] : f32 from vector<1x1x1xf32>
    %243 = arith.addf %198, %216 : vector<24x1xf32>
    %244 = math.log %243 : vector<24x1xf32>
    %245 = arith.addf %244, %186 : vector<24x1xf32>
    %246 = arith.ori %222, %232 : vector<24x1xi1>
    %cst_85 = arith.constant 0.000000e+00 : f32
    %247 = vector.broadcast %cst_85 : f32 to vector<24x1xf32>
    %248 = arith.select %246, %245, %247 : vector<24x1xi1>, vector<24x1xf32>
    %249 = vector.shape_cast %248 : vector<24x1xf32> to vector<1x24x1xf32>
    %cst_86 = arith.constant dense<0.000000e+00> : vector<1xf32>
    %250 = vector.multi_reduction <add>, %249, %cst_86 [1, 2] : vector<1x24x1xf32> to vector<1xf32>
    %251 = vector.shape_cast %250 : vector<1xf32> to vector<1x1x1xf32>
    %252 = vector.extract %251[0, 0, 0] : f32 from vector<1x1x1xf32>
    %253 = arith.addf %242, %252 : f32
    %254 = arith.addf %207, %216 : vector<24x1xf32>
    %255 = math.log %254 : vector<24x1xf32>
    %256 = arith.addf %255, %186 : vector<24x1xf32>
    %257 = arith.ori %227, %232 : vector<24x1xi1>
    %cst_87 = arith.constant 0.000000e+00 : f32
    %258 = vector.broadcast %cst_87 : f32 to vector<24x1xf32>
    %259 = arith.select %257, %256, %258 : vector<24x1xi1>, vector<24x1xf32>
    %260 = vector.shape_cast %259 : vector<24x1xf32> to vector<1x24x1xf32>
    %cst_88 = arith.constant dense<0.000000e+00> : vector<1xf32>
    %261 = vector.multi_reduction <add>, %260, %cst_88 [1, 2] : vector<1x24x1xf32> to vector<1xf32>
    %262 = vector.shape_cast %261 : vector<1xf32> to vector<1x1x1xf32>
    %263 = vector.extract %262[0, 0, 0] : f32 from vector<1x1x1xf32>
    %264 = arith.addf %253, %263 : f32
    %265 = arith.mulf %141, %158 : vector<8x8xf32>
    %266 = vector.shape_cast %265 : vector<8x8xf32> to vector<1x8x8xf32>
    %cst_89 = arith.constant dense<0.000000e+00> : vector<1xf32>
    %267 = vector.multi_reduction <add>, %266, %cst_89 [1, 2] : vector<1x8x8xf32> to vector<1xf32>
    %268 = vector.shape_cast %267 : vector<1xf32> to vector<1x1x1xf32>
    %269 = vector.extract %268[0, 0, 0] : f32 from vector<1x1x1xf32>
    %270 = arith.mulf %141, %175 : vector<8x8xf32>
    %271 = vector.shape_cast %270 : vector<8x8xf32> to vector<1x8x8xf32>
    %cst_90 = arith.constant dense<0.000000e+00> : vector<1xf32>
    %272 = vector.multi_reduction <add>, %271, %cst_90 [1, 2] : vector<1x8x8xf32> to vector<1xf32>
    %273 = vector.shape_cast %272 : vector<1xf32> to vector<1x1x1xf32>
    %274 = vector.extract %273[0, 0, 0] : f32 from vector<1x1x1xf32>
    %275 = arith.addf %269, %274 : f32
    %276 = arith.mulf %158, %175 : vector<8x8xf32>
    %277 = vector.shape_cast %276 : vector<8x8xf32> to vector<1x8x8xf32>
    %cst_91 = arith.constant dense<0.000000e+00> : vector<1xf32>
    %278 = vector.multi_reduction <add>, %277, %cst_91 [1, 2] : vector<1x8x8xf32> to vector<1xf32>
    %279 = vector.shape_cast %278 : vector<1xf32> to vector<1x1x1xf32>
    %280 = vector.extract %279[0, 0, 0] : f32 from vector<1x1x1xf32>
    %281 = arith.addf %275, %280 : f32
    %282 = arith.mulf %124, %281 : f32
    %cst_92 = arith.constant 2.000000e+00 : f32
    %283 = arith.mulf %cst_92, %282 : f32
    %284 = arith.subf %264, %283 : f32
    %cst_93 = arith.constant 1.600000e+01 : f32
    %285 = arith.divf %284, %cst_93 : f32
    %c2_94 = arith.constant 2 : index
    %c0_95 = arith.constant 0 : index
    %c0_96 = arith.constant 0 : index
    %286 = vector.load %arg2[%c2_94, %c0_95, %c0_96] : memref<3x8x32xf32, #tpu.memory_space<vmem>>, vector<1x8x32xf32>
    %287 = vector.shape_cast %286 : vector<1x8x32xf32> to vector<8x32xf32>
    %288 = vector.shape_cast %287 : vector<8x32xf32> to vector<1x8x32xf32>
    %cst_97 = arith.constant dense<0.000000e+00> : vector<1xf32>
    %289 = vector.multi_reduction <add>, %288, %cst_97 [1, 2] : vector<1x8x32xf32> to vector<1xf32>
    %290 = vector.shape_cast %289 : vector<1xf32> to vector<1x1x1xf32>
    %291 = vector.extract %290[0, 0, 0] : f32 from vector<1x1x1xf32>
    %cst_98 = arith.constant 2.560000e+02 : f32
    %292 = arith.divf %291, %cst_98 : f32
    %293 = vector.broadcast %292 : f32 to vector<8x32xf32>
    %294 = arith.subf %287, %293 : vector<8x32xf32>
    %295 = arith.mulf %294, %294 : vector<8x32xf32>
    %cst_99 = arith.constant dense<0.000000e+00> : vector<8xf32>
    %296 = vector.multi_reduction <add>, %295, %cst_99 [1] : vector<8x32xf32> to vector<8xf32>
    %297 = vector.shape_cast %296 : vector<8xf32> to vector<8x1xf32>
    %cst_100 = arith.constant 1.000000e-24 : f32
    %298 = vector.broadcast %cst_100 : f32 to vector<8x1xf32>
    %299 = arith.maximumf %297, %298 : vector<8x1xf32>
    %300 = math.rsqrt %299 : vector<8x1xf32>
    %301 = vector.broadcast %300 : vector<8x1xf32> to vector<8x32xf32>
    %302 = arith.mulf %294, %301 : vector<8x32xf32>
    %c0_101 = arith.constant 0 : index
    %c0_102 = arith.constant 0 : index
    %c0_103 = arith.constant 0 : index
    %303 = vector.load %arg2[%c0_101, %c0_102, %c0_103] : memref<3x8x32xf32, #tpu.memory_space<vmem>>, vector<1x8x32xf32>
    %304 = vector.shape_cast %303 : vector<1x8x32xf32> to vector<8x32xf32>
    %305 = vector.shape_cast %304 : vector<8x32xf32> to vector<1x8x32xf32>
    %cst_104 = arith.constant dense<0.000000e+00> : vector<1xf32>
    %306 = vector.multi_reduction <add>, %305, %cst_104 [1, 2] : vector<1x8x32xf32> to vector<1xf32>
    %307 = vector.shape_cast %306 : vector<1xf32> to vector<1x1x1xf32>
    %308 = vector.extract %307[0, 0, 0] : f32 from vector<1x1x1xf32>
    %cst_105 = arith.constant 2.560000e+02 : f32
    %309 = arith.divf %308, %cst_105 : f32
    %310 = vector.broadcast %309 : f32 to vector<8x32xf32>
    %311 = arith.subf %304, %310 : vector<8x32xf32>
    %312 = arith.mulf %311, %311 : vector<8x32xf32>
    %cst_106 = arith.constant dense<0.000000e+00> : vector<8xf32>
    %313 = vector.multi_reduction <add>, %312, %cst_106 [1] : vector<8x32xf32> to vector<8xf32>
    %314 = vector.shape_cast %313 : vector<8xf32> to vector<8x1xf32>
    %cst_107 = arith.constant 1.000000e-24 : f32
    %315 = vector.broadcast %cst_107 : f32 to vector<8x1xf32>
    %316 = arith.maximumf %314, %315 : vector<8x1xf32>
    %317 = math.rsqrt %316 : vector<8x1xf32>
    %318 = vector.broadcast %317 : vector<8x1xf32> to vector<8x32xf32>
    %319 = arith.mulf %311, %318 : vector<8x32xf32>
    %320 = arith.subf %319, %302 : vector<8x32xf32>
    %c1_108 = arith.constant 1 : index
    %c0_109 = arith.constant 0 : index
    %c0_110 = arith.constant 0 : index
    %321 = vector.load %arg2[%c1_108, %c0_109, %c0_110] : memref<3x8x32xf32, #tpu.memory_space<vmem>>, vector<1x8x32xf32>
    %322 = vector.shape_cast %321 : vector<1x8x32xf32> to vector<8x32xf32>
    %323 = vector.shape_cast %322 : vector<8x32xf32> to vector<1x8x32xf32>
    %cst_111 = arith.constant dense<0.000000e+00> : vector<1xf32>
    %324 = vector.multi_reduction <add>, %323, %cst_111 [1, 2] : vector<1x8x32xf32> to vector<1xf32>
    %325 = vector.shape_cast %324 : vector<1xf32> to vector<1x1x1xf32>
    %326 = vector.extract %325[0, 0, 0] : f32 from vector<1x1x1xf32>
    %cst_112 = arith.constant 2.560000e+02 : f32
    %327 = arith.divf %326, %cst_112 : f32
    %328 = vector.broadcast %327 : f32 to vector<8x32xf32>
    %329 = arith.subf %322, %328 : vector<8x32xf32>
    %330 = arith.mulf %329, %329 : vector<8x32xf32>
    %cst_113 = arith.constant dense<0.000000e+00> : vector<8xf32>
    %331 = vector.multi_reduction <add>, %330, %cst_113 [1] : vector<8x32xf32> to vector<8xf32>
    %332 = vector.shape_cast %331 : vector<8xf32> to vector<8x1xf32>
    %cst_114 = arith.constant 1.000000e-24 : f32
    %333 = vector.broadcast %cst_114 : f32 to vector<8x1xf32>
    %334 = arith.maximumf %332, %333 : vector<8x1xf32>
    %335 = math.rsqrt %334 : vector<8x1xf32>
    %336 = vector.broadcast %335 : vector<8x1xf32> to vector<8x32xf32>
    %337 = arith.mulf %329, %336 : vector<8x32xf32>
    %338 = arith.subf %337, %302 : vector<8x32xf32>
    %339 = arith.mulf %320, %320 : vector<8x32xf32>
    %340 = vector.shape_cast %339 : vector<8x32xf32> to vector<1x8x32xf32>
    %cst_115 = arith.constant dense<0.000000e+00> : vector<1xf32>
    %341 = vector.multi_reduction <add>, %340, %cst_115 [1, 2] : vector<1x8x32xf32> to vector<1xf32>
    %342 = vector.shape_cast %341 : vector<1xf32> to vector<1x1x1xf32>
    %343 = vector.extract %342[0, 0, 0] : f32 from vector<1x1x1xf32>
    %344 = math.sqrt %343 : f32
    %345 = arith.mulf %338, %338 : vector<8x32xf32>
    %346 = vector.shape_cast %345 : vector<8x32xf32> to vector<1x8x32xf32>
    %cst_116 = arith.constant dense<0.000000e+00> : vector<1xf32>
    %347 = vector.multi_reduction <add>, %346, %cst_116 [1, 2] : vector<1x8x32xf32> to vector<1xf32>
    %348 = vector.shape_cast %347 : vector<1xf32> to vector<1x1x1xf32>
    %349 = vector.extract %348[0, 0, 0] : f32 from vector<1x1x1xf32>
    %350 = math.sqrt %349 : f32
    %351 = arith.addf %344, %350 : f32
    %cst_117 = arith.constant 0.000000e+00 : f32
    %352 = arith.addf %cst_117, %351 : f32
    %c2_118 = arith.constant 2 : index
    %c0_119 = arith.constant 0 : index
    %c0_120 = arith.constant 0 : index
    %353 = vector.load %arg3[%c2_118, %c0_119, %c0_120] : memref<3x8x48xf32, #tpu.memory_space<vmem>>, vector<1x8x48xf32>
    %354 = vector.shape_cast %353 : vector<1x8x48xf32> to vector<8x48xf32>
    %355 = vector.shape_cast %354 : vector<8x48xf32> to vector<1x8x48xf32>
    %cst_121 = arith.constant dense<0.000000e+00> : vector<1xf32>
    %356 = vector.multi_reduction <add>, %355, %cst_121 [1, 2] : vector<1x8x48xf32> to vector<1xf32>
    %357 = vector.shape_cast %356 : vector<1xf32> to vector<1x1x1xf32>
    %358 = vector.extract %357[0, 0, 0] : f32 from vector<1x1x1xf32>
    %cst_122 = arith.constant 3.840000e+02 : f32
    %359 = arith.divf %358, %cst_122 : f32
    %360 = vector.broadcast %359 : f32 to vector<8x48xf32>
    %361 = arith.subf %354, %360 : vector<8x48xf32>
    %362 = arith.mulf %361, %361 : vector<8x48xf32>
    %cst_123 = arith.constant dense<0.000000e+00> : vector<8xf32>
    %363 = vector.multi_reduction <add>, %362, %cst_123 [1] : vector<8x48xf32> to vector<8xf32>
    %364 = vector.shape_cast %363 : vector<8xf32> to vector<8x1xf32>
    %cst_124 = arith.constant 1.000000e-24 : f32
    %365 = vector.broadcast %cst_124 : f32 to vector<8x1xf32>
    %366 = arith.maximumf %364, %365 : vector<8x1xf32>
    %367 = math.rsqrt %366 : vector<8x1xf32>
    %368 = vector.broadcast %367 : vector<8x1xf32> to vector<8x48xf32>
    %369 = arith.mulf %361, %368 : vector<8x48xf32>
    %c0_125 = arith.constant 0 : index
    %c0_126 = arith.constant 0 : index
    %c0_127 = arith.constant 0 : index
    %370 = vector.load %arg3[%c0_125, %c0_126, %c0_127] : memref<3x8x48xf32, #tpu.memory_space<vmem>>, vector<1x8x48xf32>
    %371 = vector.shape_cast %370 : vector<1x8x48xf32> to vector<8x48xf32>
    %372 = vector.shape_cast %371 : vector<8x48xf32> to vector<1x8x48xf32>
    %cst_128 = arith.constant dense<0.000000e+00> : vector<1xf32>
    %373 = vector.multi_reduction <add>, %372, %cst_128 [1, 2] : vector<1x8x48xf32> to vector<1xf32>
    %374 = vector.shape_cast %373 : vector<1xf32> to vector<1x1x1xf32>
    %375 = vector.extract %374[0, 0, 0] : f32 from vector<1x1x1xf32>
    %cst_129 = arith.constant 3.840000e+02 : f32
    %376 = arith.divf %375, %cst_129 : f32
    %377 = vector.broadcast %376 : f32 to vector<8x48xf32>
    %378 = arith.subf %371, %377 : vector<8x48xf32>
    %379 = arith.mulf %378, %378 : vector<8x48xf32>
    %cst_130 = arith.constant dense<0.000000e+00> : vector<8xf32>
    %380 = vector.multi_reduction <add>, %379, %cst_130 [1] : vector<8x48xf32> to vector<8xf32>
    %381 = vector.shape_cast %380 : vector<8xf32> to vector<8x1xf32>
    %cst_131 = arith.constant 1.000000e-24 : f32
    %382 = vector.broadcast %cst_131 : f32 to vector<8x1xf32>
    %383 = arith.maximumf %381, %382 : vector<8x1xf32>
    %384 = math.rsqrt %383 : vector<8x1xf32>
    %385 = vector.broadcast %384 : vector<8x1xf32> to vector<8x48xf32>
    %386 = arith.mulf %378, %385 : vector<8x48xf32>
    %387 = arith.subf %386, %369 : vector<8x48xf32>
    %c1_132 = arith.constant 1 : index
    %c0_133 = arith.constant 0 : index
    %c0_134 = arith.constant 0 : index
    %388 = vector.load %arg3[%c1_132, %c0_133, %c0_134] : memref<3x8x48xf32, #tpu.memory_space<vmem>>, vector<1x8x48xf32>
    %389 = vector.shape_cast %388 : vector<1x8x48xf32> to vector<8x48xf32>
    %390 = vector.shape_cast %389 : vector<8x48xf32> to vector<1x8x48xf32>
    %cst_135 = arith.constant dense<0.000000e+00> : vector<1xf32>
    %391 = vector.multi_reduction <add>, %390, %cst_135 [1, 2] : vector<1x8x48xf32> to vector<1xf32>
    %392 = vector.shape_cast %391 : vector<1xf32> to vector<1x1x1xf32>
    %393 = vector.extract %392[0, 0, 0] : f32 from vector<1x1x1xf32>
    %cst_136 = arith.constant 3.840000e+02 : f32
    %394 = arith.divf %393, %cst_136 : f32
    %395 = vector.broadcast %394 : f32 to vector<8x48xf32>
    %396 = arith.subf %389, %395 : vector<8x48xf32>
    %397 = arith.mulf %396, %396 : vector<8x48xf32>
    %cst_137 = arith.constant dense<0.000000e+00> : vector<8xf32>
    %398 = vector.multi_reduction <add>, %397, %cst_137 [1] : vector<8x48xf32> to vector<8xf32>
    %399 = vector.shape_cast %398 : vector<8xf32> to vector<8x1xf32>
    %cst_138 = arith.constant 1.000000e-24 : f32
    %400 = vector.broadcast %cst_138 : f32 to vector<8x1xf32>
    %401 = arith.maximumf %399, %400 : vector<8x1xf32>
    %402 = math.rsqrt %401 : vector<8x1xf32>
    %403 = vector.broadcast %402 : vector<8x1xf32> to vector<8x48xf32>
    %404 = arith.mulf %396, %403 : vector<8x48xf32>
    %405 = arith.subf %404, %369 : vector<8x48xf32>
    %406 = arith.mulf %387, %387 : vector<8x48xf32>
    %407 = vector.shape_cast %406 : vector<8x48xf32> to vector<1x8x48xf32>
    %cst_139 = arith.constant dense<0.000000e+00> : vector<1xf32>
    %408 = vector.multi_reduction <add>, %407, %cst_139 [1, 2] : vector<1x8x48xf32> to vector<1xf32>
    %409 = vector.shape_cast %408 : vector<1xf32> to vector<1x1x1xf32>
    %410 = vector.extract %409[0, 0, 0] : f32 from vector<1x1x1xf32>
    %411 = math.sqrt %410 : f32
    %412 = arith.mulf %405, %405 : vector<8x48xf32>
    %413 = vector.shape_cast %412 : vector<8x48xf32> to vector<1x8x48xf32>
    %cst_140 = arith.constant dense<0.000000e+00> : vector<1xf32>
    %414 = vector.multi_reduction <add>, %413, %cst_140 [1, 2] : vector<1x8x48xf32> to vector<1xf32>
    %415 = vector.shape_cast %414 : vector<1xf32> to vector<1x1x1xf32>
    %416 = vector.extract %415[0, 0, 0] : f32 from vector<1x1x1xf32>
    %417 = math.sqrt %416 : f32
    %418 = arith.addf %411, %417 : f32
    %419 = arith.addf %352, %418 : f32
    %c2_141 = arith.constant 2 : index
    %c0_142 = arith.constant 0 : index
    %c0_143 = arith.constant 0 : index
    %420 = vector.load %arg4[%c2_141, %c0_142, %c0_143] : memref<3x8x64xf32, #tpu.memory_space<vmem>>, vector<1x8x64xf32>
    %421 = vector.shape_cast %420 : vector<1x8x64xf32> to vector<8x64xf32>
    %422 = vector.shape_cast %421 : vector<8x64xf32> to vector<1x8x64xf32>
    %cst_144 = arith.constant dense<0.000000e+00> : vector<1xf32>
    %423 = vector.multi_reduction <add>, %422, %cst_144 [1, 2] : vector<1x8x64xf32> to vector<1xf32>
    %424 = vector.shape_cast %423 : vector<1xf32> to vector<1x1x1xf32>
    %425 = vector.extract %424[0, 0, 0] : f32 from vector<1x1x1xf32>
    %cst_145 = arith.constant 5.120000e+02 : f32
    %426 = arith.divf %425, %cst_145 : f32
    %427 = vector.broadcast %426 : f32 to vector<8x64xf32>
    %428 = arith.subf %421, %427 : vector<8x64xf32>
    %429 = arith.mulf %428, %428 : vector<8x64xf32>
    %cst_146 = arith.constant dense<0.000000e+00> : vector<8xf32>
    %430 = vector.multi_reduction <add>, %429, %cst_146 [1] : vector<8x64xf32> to vector<8xf32>
    %431 = vector.shape_cast %430 : vector<8xf32> to vector<8x1xf32>
    %cst_147 = arith.constant 1.000000e-24 : f32
    %432 = vector.broadcast %cst_147 : f32 to vector<8x1xf32>
    %433 = arith.maximumf %431, %432 : vector<8x1xf32>
    %434 = math.rsqrt %433 : vector<8x1xf32>
    %435 = vector.broadcast %434 : vector<8x1xf32> to vector<8x64xf32>
    %436 = arith.mulf %428, %435 : vector<8x64xf32>
    %c0_148 = arith.constant 0 : index
    %c0_149 = arith.constant 0 : index
    %c0_150 = arith.constant 0 : index
    %437 = vector.load %arg4[%c0_148, %c0_149, %c0_150] : memref<3x8x64xf32, #tpu.memory_space<vmem>>, vector<1x8x64xf32>
    %438 = vector.shape_cast %437 : vector<1x8x64xf32> to vector<8x64xf32>
    %439 = vector.shape_cast %438 : vector<8x64xf32> to vector<1x8x64xf32>
    %cst_151 = arith.constant dense<0.000000e+00> : vector<1xf32>
    %440 = vector.multi_reduction <add>, %439, %cst_151 [1, 2] : vector<1x8x64xf32> to vector<1xf32>
    %441 = vector.shape_cast %440 : vector<1xf32> to vector<1x1x1xf32>
    %442 = vector.extract %441[0, 0, 0] : f32 from vector<1x1x1xf32>
    %cst_152 = arith.constant 5.120000e+02 : f32
    %443 = arith.divf %442, %cst_152 : f32
    %444 = vector.broadcast %443 : f32 to vector<8x64xf32>
    %445 = arith.subf %438, %444 : vector<8x64xf32>
    %446 = arith.mulf %445, %445 : vector<8x64xf32>
    %cst_153 = arith.constant dense<0.000000e+00> : vector<8xf32>
    %447 = vector.multi_reduction <add>, %446, %cst_153 [1] : vector<8x64xf32> to vector<8xf32>
    %448 = vector.shape_cast %447 : vector<8xf32> to vector<8x1xf32>
    %cst_154 = arith.constant 1.000000e-24 : f32
    %449 = vector.broadcast %cst_154 : f32 to vector<8x1xf32>
    %450 = arith.maximumf %448, %449 : vector<8x1xf32>
    %451 = math.rsqrt %450 : vector<8x1xf32>
    %452 = vector.broadcast %451 : vector<8x1xf32> to vector<8x64xf32>
    %453 = arith.mulf %445, %452 : vector<8x64xf32>
    %454 = arith.subf %453, %436 : vector<8x64xf32>
    %c1_155 = arith.constant 1 : index
    %c0_156 = arith.constant 0 : index
    %c0_157 = arith.constant 0 : index
    %455 = vector.load %arg4[%c1_155, %c0_156, %c0_157] : memref<3x8x64xf32, #tpu.memory_space<vmem>>, vector<1x8x64xf32>
    %456 = vector.shape_cast %455 : vector<1x8x64xf32> to vector<8x64xf32>
    %457 = vector.shape_cast %456 : vector<8x64xf32> to vector<1x8x64xf32>
    %cst_158 = arith.constant dense<0.000000e+00> : vector<1xf32>
    %458 = vector.multi_reduction <add>, %457, %cst_158 [1, 2] : vector<1x8x64xf32> to vector<1xf32>
    %459 = vector.shape_cast %458 : vector<1xf32> to vector<1x1x1xf32>
    %460 = vector.extract %459[0, 0, 0] : f32 from vector<1x1x1xf32>
    %cst_159 = arith.constant 5.120000e+02 : f32
    %461 = arith.divf %460, %cst_159 : f32
    %462 = vector.broadcast %461 : f32 to vector<8x64xf32>
    %463 = arith.subf %456, %462 : vector<8x64xf32>
    %464 = arith.mulf %463, %463 : vector<8x64xf32>
    %cst_160 = arith.constant dense<0.000000e+00> : vector<8xf32>
    %465 = vector.multi_reduction <add>, %464, %cst_160 [1] : vector<8x64xf32> to vector<8xf32>
    %466 = vector.shape_cast %465 : vector<8xf32> to vector<8x1xf32>
    %cst_161 = arith.constant 1.000000e-24 : f32
    %467 = vector.broadcast %cst_161 : f32 to vector<8x1xf32>
    %468 = arith.maximumf %466, %467 : vector<8x1xf32>
    %469 = math.rsqrt %468 : vector<8x1xf32>
    %470 = vector.broadcast %469 : vector<8x1xf32> to vector<8x64xf32>
    %471 = arith.mulf %463, %470 : vector<8x64xf32>
    %472 = arith.subf %471, %436 : vector<8x64xf32>
    %473 = arith.mulf %454, %454 : vector<8x64xf32>
    %474 = vector.shape_cast %473 : vector<8x64xf32> to vector<1x8x64xf32>
    %cst_162 = arith.constant dense<0.000000e+00> : vector<1xf32>
    %475 = vector.multi_reduction <add>, %474, %cst_162 [1, 2] : vector<1x8x64xf32> to vector<1xf32>
    %476 = vector.shape_cast %475 : vector<1xf32> to vector<1x1x1xf32>
    %477 = vector.extract %476[0, 0, 0] : f32 from vector<1x1x1xf32>
    %478 = math.sqrt %477 : f32
    %479 = arith.mulf %472, %472 : vector<8x64xf32>
    %480 = vector.shape_cast %479 : vector<8x64xf32> to vector<1x8x64xf32>
    %cst_163 = arith.constant dense<0.000000e+00> : vector<1xf32>
    %481 = vector.multi_reduction <add>, %480, %cst_163 [1, 2] : vector<1x8x64xf32> to vector<1xf32>
    %482 = vector.shape_cast %481 : vector<1xf32> to vector<1x1x1xf32>
    %483 = vector.extract %482[0, 0, 0] : f32 from vector<1x1x1xf32>
    %484 = math.sqrt %483 : f32
    %485 = arith.addf %478, %484 : f32
    %486 = arith.addf %419, %485 : f32
    %c0_164 = arith.constant 0 : index
    %c0_165 = arith.constant 0 : index
    %c0_166 = arith.constant 0 : index
    %487 = vector.load %arg5[%c0_164, %c0_165, %c0_166] : memref<2x3x128xf32, #tpu.memory_space<vmem>>, vector<1x3x128xf32>
    %488 = vector.shape_cast %487 : vector<1x3x128xf32> to vector<3x128xf32>
    %c1_167 = arith.constant 1 : index
    %c0_168 = arith.constant 0 : index
    %c0_169 = arith.constant 0 : index
    %489 = vector.load %arg5[%c1_167, %c0_168, %c0_169] : memref<2x3x128xf32, #tpu.memory_space<vmem>>, vector<1x3x128xf32>
    %490 = vector.shape_cast %489 : vector<1x3x128xf32> to vector<3x128xf32>
    %cst_170 = arith.constant 1.000000e+00 : f32
    %491 = vector.broadcast %cst_170 : f32 to vector<3x128xf32>
    %492 = arith.addf %491, %490 : vector<3x128xf32>
    %493 = arith.mulf %488, %488 : vector<3x128xf32>
    %494 = arith.subf %492, %493 : vector<3x128xf32>
    %495 = math.exp %490 : vector<3x128xf32>
    %496 = arith.subf %494, %495 : vector<3x128xf32>
    %497 = vector.shape_cast %496 : vector<3x128xf32> to vector<1x3x128xf32>
    %cst_171 = arith.constant dense<0.000000e+00> : vector<1xf32>
    %498 = vector.multi_reduction <add>, %497, %cst_171 [1, 2] : vector<1x3x128xf32> to vector<1xf32>
    %499 = vector.shape_cast %498 : vector<1xf32> to vector<1x1x1xf32>
    %500 = vector.extract %499[0, 0, 0] : f32 from vector<1x1x1xf32>
    %cst_172 = arith.constant -5.000000e-01 : f32
    %501 = arith.mulf %cst_172, %500 : f32
    %502 = arith.addf %122, %285 : f32
    %cst_173 = arith.constant 0.699999988 : f32
    %503 = arith.mulf %cst_173, %486 : f32
    %504 = arith.addf %502, %503 : f32
    %505 = arith.addf %504, %501 : f32
    %c0_174 = arith.constant 0 : index
    %c0_175 = arith.constant 0 : index
    %506 = memref.load %arg7[%c0_174, %c0_175] : memref<1x2xf32, #tpu.memory_space<smem>>
    memref.store %505, %arg7[%c0_174, %c0_175] : memref<1x2xf32, #tpu.memory_space<smem>>
    %c0_176 = arith.constant 0 : index
    %c1_177 = arith.constant 1 : index
    %507 = memref.load %arg7[%c0_176, %c1_177] : memref<1x2xf32, #tpu.memory_space<smem>>
    memref.store %501, %arg7[%c0_176, %c1_177] : memref<1x2xf32, #tpu.memory_space<smem>>
    return
  }
}

</mosaic_0001>

<llo_original>
// kernel: _loss_core.1
$region0: #{_loss_core.1}
  #allocation0 [shape = 'u32[]', space=smem, size = 0x4, offset = 0x4, fixed_abs, tag = 'smem constant byte address 0x4 - core index']
  #allocation1 [shape = 'u32[144,128]{1,0:T(1,128)}', space=vmem, size = 0x12000, scoped, tag = 'internal scratch']
  #allocation2 [shape = 'f32[1,1]{1,0:T(1,128)S(6)}', space=smem, size = 0x200, scoped, tag = 'scoped memory for _loss_core.1']
  %s0 = inlined_call_operand.vmem [shape: f32[6,8,16], index: 0, kind: input, shape index: {}]
  %s1 = inlined_call_operand.vmem [shape: f32[3,8,8], index: 1, kind: input, shape index: {}]
  %s2 = inlined_call_operand.vmem [shape: f32[3,8,32], index: 2, kind: input, shape index: {}]
  %s3 = inlined_call_operand.vmem [shape: f32[3,8,48], index: 3, kind: input, shape index: {}]
  %s4 = inlined_call_operand.vmem [shape: f32[3,8,64], index: 4, kind: input, shape index: {}]
  %s5 = inlined_call_operand.vmem [shape: f32[2,3,128], index: 5, kind: input, shape index: {}]
  %s6 = inlined_call_operand.<no memory space> [shape: f32[1,1], index: 6, kind: input, shape index: {}]
  %s7 = inlined_call_operand.vmem [shape: f32[1,2], index: 7, kind: output, shape index: {}]
  %s8 = sld [smem:[#allocation0]]
  $region38: #{_loss_core.1} parent=0
    _
  %s10 = ssub.s32 1, %s8
  %s11 = scalar_select 0, %s10, %s8
  %12 = sst [smem:[#allocation2]] %s6
  $region1: #{_loss_core.1} parent=0
    #allocation3 [shape = 'u8[512]{0}', space=smem, size = 0x200, scoped, tag = 'output window, operand 0, single buffered']
    #allocation4 [shape = 's32[1]{0}', space=sflag, size = 0x4, scoped, tag = 'scoped memory for _loss_core.1']
    %13 = vsyncpa [#allocation4], 0
    // Predicated region
    $region2: #{_loss_core.1} parent=1 // pred_check
      _
    $region3: #{_loss_core.1} parent=1 // pred_check_branch
      %15 = sbr.rel (0) target = $region5
    $region4: #{_loss_core.1} parent=1 // pred_region
      _
    $region5: #{_loss_core.1} parent=1 // pred_fallthru
      _
    // Predicated region
    $region6: #{_loss_core.1} parent=1 // pred_check
      _
    $region7: #{_loss_core.1} parent=1 // pred_check_branch
      %17 = sbr.rel (0) target = $region9
    $region8: #{_loss_core.1} parent=1 // pred_region
      _
    $region9: #{_loss_core.1} parent=1 // pred_fallthru
      _
    // Predicated region
    $region10: #{_loss_core.1} parent=1 // pred_check
      _
    $region11: #{_loss_core.1} parent=1 // pred_check_branch
      %19 = sbr.rel (0) target = $region13
    $region12: #{_loss_core.1} parent=1 // pred_region
      _
    $region13: #{_loss_core.1} parent=1 // pred_fallthru
      _
    // Predicated region
    $region14: #{_loss_core.1} parent=1 // pred_check
      _
    $region15: #{_loss_core.1} parent=1 // pred_check_branch
      %21 = sbr.rel (0) target = $region17
    $region16: #{_loss_core.1} parent=1 // pred_region
      _
    $region17: #{_loss_core.1} parent=1 // pred_fallthru
      _
    // Predicated region
    $region18: #{_loss_core.1} parent=1 // pred_check
      _
    $region19: #{_loss_core.1} parent=1 // pred_check_branch
      %23 = sbr.rel (0) target = $region21
    $region20: #{_loss_core.1} parent=1 // pred_region
      _
    $region21: #{_loss_core.1} parent=1 // pred_fallthru
      _
    // Predicated region
    $region22: #{_loss_core.1} parent=1 // pred_check
      _
    $region23: #{_loss_core.1} parent=1 // pred_check_branch
      %25 = sbr.rel (0) target = $region25
    $region24: #{_loss_core.1} parent=1 // pred_region
      _
    $region25: #{_loss_core.1} parent=1 // pred_fallthru
      _
    // Predicated region
    $region26: #{_loss_core.1} parent=1 // pred_check
      _
    $region27: #{_loss_core.1} parent=1 // pred_check_branch
      %27 = sbr.rel (0) target = $region29
    $region28: #{_loss_core.1} parent=1 // pred_region
      _
    $region29: #{_loss_core.1} parent=1 // pred_fallthru
      _
    %v28 = vld [vmem:[%s0] sm:$0xff]
    %vm29 = vcmask 130048
    %v30 = vsel %vm29, %v28, 0.0
    %31 = vadd.xlane.f32.xlu0 %v30
    %v32 = vpop.xlane.xlu0 %31
    %v33 = vrot.slane %v32, 4
    %v34 = vadd.f32 %v32, %v33
    %v35 = vrot.slane %v34, 2
    %v36 = vadd.f32 %v34, %v35
    %v37 = vrot.slane %v36, 1
    %v38 = vadd.f32 %v36, %v37
    %s39 = vtos %v38
    %v40 = vrcp.pop 128.0
    %s41 = vtos %v40
    %s42 = smul.f32 %s39, %s41
    %v43 = vstv %s42
    %v44 = vsub.f32 %v28, %v43
    %v45 = vmul.f32 %v44, %v44
    %v46 = vsel %vm29, %v45, 0.0
    %47 = vadd.xlane.f32.xlu0 %v46
    %v48 = vpop.xlane.xlu0 %47
    %v49 = vmax.f32 %v48, 1e-24
    %v50 = vrsqrt.pop %v49
    %v51 = vmul.f32 %v44, %v50
    %s52 = scalar_lea.vmem %s0, 24
    %v53 = vld [vmem:[%s52] sm:$0xff]
    %v54 = vsel %vm29, %v53, 0.0
    %55 = vadd.xlane.f32.xlu0 %v54
    %v56 = vpop.xlane.xlu0 %55
    %v57 = vrot.slane %v56, 4
    %v58 = vadd.f32 %v56, %v57
    %v59 = vrot.slane %v58, 2
    %v60 = vadd.f32 %v58, %v59
    %v61 = vrot.slane %v60, 1
    %v62 = vadd.f32 %v60, %v61
    %s63 = vtos %v62
    %v64 = vrcp.pop 128.0
    %s65 = vtos %v64
    %s66 = smul.f32 %s63, %s65
    %v67 = vstv %s66
    %v68 = vsub.f32 %v53, %v67
    %v69 = vmul.f32 %v68, %v68
    %v70 = vsel %vm29, %v69, 0.0
    %71 = vadd.xlane.f32.xlu0 %v70
    %v72 = vpop.xlane.xlu0 %71
    %v73 = vmax.f32 %v72, 1e-24
    %v74 = vrsqrt.pop %v73
    %v75 = vmul.f32 %v68, %v74
    %v76 = vmul.f32 %v51, %v75
    %v77 = vsel %vm29, %v76, 0.0
    %78 = vadd.xlane.f32.xlu0 %v77
    %v79 = vpop.xlane.xlu0 %78
    %v80 = vrot.slane %v79, 4
    %v81 = vadd.f32 %v79, %v80
    %v82 = vrot.slane %v81, 2
    %v83 = vadd.f32 %v81, %v82
    %v84 = vrot.slane %v83, 1
    %v85 = vadd.f32 %v83, %v84
    %s86 = vtos %v85
    %v87 = vrcp.pop 128.0
    %s88 = vtos %v87
    %s89 = smul.f32 %s86, %s88
    %s90 = sadd.f32 %s89, 0.0
    %s91 = scalar_lea.vmem %s0, 8
    %v92 = vld [vmem:[%s91] sm:$0xff]
    %v93 = vsel %vm29, %v92, 0.0
    %94 = vadd.xlane.f32.xlu0 %v93
    %v95 = vpop.xlane.xlu0 %94
    %v96 = vrot.slane %v95, 4
    %v97 = vadd.f32 %v95, %v96
    %v98 = vrot.slane %v97, 2
    %v99 = vadd.f32 %v97, %v98
    %v100 = vrot.slane %v99, 1
    %v101 = vadd.f32 %v99, %v100
    %s102 = vtos %v101
    %v103 = vrcp.pop 128.0
    %s104 = vtos %v103
    %s105 = smul.f32 %s102, %s104
    %v106 = vstv %s105
    %v107 = vsub.f32 %v92, %v106
    %v108 = vmul.f32 %v107, %v107
    %v109 = vsel %vm29, %v108, 0.0
    %110 = vadd.xlane.f32.xlu0 %v109
    %v111 = vpop.xlane.xlu0 %110
    %v112 = vmax.f32 %v111, 1e-24
    %v113 = vrsqrt.pop %v112
    %v114 = vmul.f32 %v107, %v113
    %s115 = scalar_lea.vmem %s0, 32
    %v116 = vld [vmem:[%s115] sm:$0xff]
    %v117 = vsel %vm29, %v116, 0.0
    %118 = vadd.xlane.f32.xlu0 %v117
    %v119 = vpop.xlane.xlu0 %118
    %v120 = vrot.slane %v119, 4
    %v121 = vadd.f32 %v119, %v120
    %v122 = vrot.slane %v121, 2
    %v123 = vadd.f32 %v121, %v122
    %v124 = vrot.slane %v123, 1
    %v125 = vadd.f32 %v123, %v124
    %s126 = vtos %v125
    %v127 = vrcp.pop 128.0
    %s128 = vtos %v127
    %s129 = smul.f32 %s126, %s128
    %v130 = vstv %s129
    %v131 = vsub.f32 %v116, %v130
    %v132 = vmul.f32 %v131, %v131
    %v133 = vsel %vm29, %v132, 0.0
    %134 = vadd.xlane.f32.xlu0 %v133
    %v135 = vpop.xlane.xlu0 %134
    %v136 = vmax.f32 %v135, 1e-24
    %v137 = vrsqrt.pop %v136
    %v138 = vmul.f32 %v131, %v137
    %v139 = vmul.f32 %v114, %v138
    %v140 = vsel %vm29, %v139, 0.0
    %141 = vadd.xlane.f32.xlu0 %v140
    %v142 = vpop.xlane.xlu0 %141
    %v143 = vrot.slane %v142, 4
    %v144 = vadd.f32 %v142, %v143
    %v145 = vrot.slane %v144, 2
    %v146 = vadd.f32 %v144, %v145
    %v147 = vrot.slane %v146, 1
    %v148 = vadd.f32 %v146, %v147
    %s149 = vtos %v148
    %v150 = vrcp.pop 128.0
    %s151 = vtos %v150
    %s152 = smul.f32 %s149, %s151
    %s153 = sadd.f32 %s90, %s152
    %s154 = scalar_lea.vmem %s0, 16
    %v155 = vld [vmem:[%s154] sm:$0xff]
    %v156 = vsel %vm29, %v155, 0.0
    %157 = vadd.xlane.f32.xlu0 %v156
    %v158 = vpop.xlane.xlu0 %157
    %v159 = vrot.slane %v158, 4
    %v160 = vadd.f32 %v158, %v159
    %v161 = vrot.slane %v160, 2
    %v162 = vadd.f32 %v160, %v161
    %v163 = vrot.slane %v162, 1
    %v164 = vadd.f32 %v162, %v163
    %s165 = vtos %v164
    %v166 = vrcp.pop 128.0
    %s167 = vtos %v166
    %s168 = smul.f32 %s165, %s167
    %v169 = vstv %s168
    %v170 = vsub.f32 %v155, %v169
    %v171 = vmul.f32 %v170, %v170
    %v172 = vsel %vm29, %v171, 0.0
    %173 = vadd.xlane.f32.xlu0 %v172
    %v174 = vpop.xlane.xlu0 %173
    %v175 = vmax.f32 %v174, 1e-24
    %v176 = vrsqrt.pop %v175
    %v177 = vmul.f32 %v170, %v176
    %s178 = scalar_lea.vmem %s0, 40
    %v179 = vld [vmem:[%s178] sm:$0xff]
    %v180 = vsel %vm29, %v179, 0.0
    %181 = vadd.xlane.f32.xlu0 %v180
    %v182 = vpop.xlane.xlu0 %181
    %v183 = vrot.slane %v182, 4
    %v184 = vadd.f32 %v182, %v183
    %v185 = vrot.slane %v184, 2
    %v186 = vadd.f32 %v184, %v185
    %v187 = vrot.slane %v186, 1
    %v188 = vadd.f32 %v186, %v187
    %s189 = vtos %v188
    %v190 = vrcp.pop 128.0
    %s191 = vtos %v190
    %s192 = smul.f32 %s189, %s191
    %v193 = vstv %s192
    %v194 = vsub.f32 %v179, %v193
    %v195 = vmul.f32 %v194, %v194
    %v196 = vsel %vm29, %v195, 0.0
    %197 = vadd.xlane.f32.xlu0 %v196
    %v198 = vpop.xlane.xlu0 %197
    %v199 = vmax.f32 %v198, 1e-24
    %v200 = vrsqrt.pop %v199
    %v201 = vmul.f32 %v194, %v200
    %v202 = vmul.f32 %v177, %v201
    %v203 = vsel %vm29, %v202, 0.0
    %204 = vadd.xlane.f32.xlu0 %v203
    %v205 = vpop.xlane.xlu0 %204
    %v206 = vrot.slane %v205, 4
    %v207 = vadd.f32 %v205, %v206
    %v208 = vrot.slane %v207, 2
    %v209 = vadd.f32 %v207, %v208
    %v210 = vrot.slane %v209, 1
    %v211 = vadd.f32 %v209, %v210
    %s212 = vtos %v211
    %v213 = vrcp.pop 128.0
    %s214 = vtos %v213
    %s215 = smul.f32 %s212, %s214
    %s216 = sadd.f32 %s153, %s215
    %s217 = sld [smem:[#allocation2]]
    %v218 = vstv %s217
    %v219 = vrcp.pop %v218
    %s220 = vtos %v219
    %v221 = vld [vmem:[%s1] sm:$0xff]
    %vm222 = vcmask 64512
    %v223 = vsel %vm222, %v221, 0.0
    %224 = vadd.xlane.f32.xlu0 %v223
    %v225 = vpop.xlane.xlu0 %224
    %v226 = vrot.slane %v225, 4
    %v227 = vadd.f32 %v225, %v226
    %v228 = vrot.slane %v227, 2
    %v229 = vadd.f32 %v227, %v228
    %v230 = vrot.slane %v229, 1
    %v231 = vadd.f32 %v229, %v230
    %s232 = vtos %v231
    %v233 = vrcp.pop 64.0
    %s234 = vtos %v233
    %s235 = smul.f32 %s232, %s234
    %v236 = vstv %s235
    %v237 = vsub.f32 %v221, %v236
    %v238 = vmul.f32 %v237, %v237
    %v239 = vsel %vm222, %v238, 0.0
    %240 = vadd.xlane.f32.xlu0 %v239
    %v241 = vpop.xlane.xlu0 %240
    %v242 = vmax.f32 %v241, 1e-24
    %v243 = vrsqrt.pop %v242
    %v244 = vmul.f32 %v237, %v243
    %s245 = scalar_lea.vmem %s1, 8
    %v246 = vld [vmem:[%s245] sm:$0xff]
    %v247 = vsel %vm222, %v246, 0.0
    %248 = vadd.xlane.f32.xlu0 %v247
    %v249 = vpop.xlane.xlu0 %248
    %v250 = vrot.slane %v249, 4
    %v251 = vadd.f32 %v249, %v250
    %v252 = vrot.slane %v251, 2
    %v253 = vadd.f32 %v251, %v252
    %v254 = vrot.slane %v253, 1
    %v255 = vadd.f32 %v253, %v254
    %s256 = vtos %v255
    %v257 = vrcp.pop 64.0
    %s258 = vtos %v257
    %s259 = smul.f32 %s256, %s258
    %v260 = vstv %s259
    %v261 = vsub.f32 %v246, %v260
    %v262 = vmul.f32 %v261, %v261
    %v263 = vsel %vm222, %v262, 0.0
    %264 = vadd.xlane.f32.xlu0 %v263
    %v265 = vpop.xlane.xlu0 %264
    %v266 = vmax.f32 %v265, 1e-24
    %v267 = vrsqrt.pop %v266
    %v268 = vmul.f32 %v261, %v267
    %s269 = scalar_lea.vmem %s1, 16
    %v270 = vld [vmem:[%s269] sm:$0xff]
    %v271 = vsel %vm222, %v270, 0.0
    %272 = vadd.xlane.f32.xlu0 %v271
    %v273 = vpop.xlane.xlu0 %272
    %v274 = vrot.slane %v273, 4
    %v275 = vadd.f32 %v273, %v274
    %v276 = vrot.slane %v275, 2
    %v277 = vadd.f32 %v275, %v276
    %v278 = vrot.slane %v277, 1
    %v279 = vadd.f32 %v277, %v278
    %s280 = vtos %v279
    %v281 = vrcp.pop 64.0
    %s282 = vtos %v281
    %s283 = smul.f32 %s280, %s282
    %v284 = vstv %s283
    %v285 = vsub.f32 %v270, %v284
    %v286 = vmul.f32 %v285, %v285
    %v287 = vsel %vm222, %v286, 0.0
    %288 = vadd.xlane.f32.xlu0 %v287
    %v289 = vpop.xlane.xlu0 %288
    %v290 = vmax.f32 %v289, 1e-24
    %v291 = vrsqrt.pop %v290
    %v292 = vmul.f32 %v285, %v291
    %v293 = vstv %s220
    %v294 = vmul.f32 %v244, %v293
    %v295 = vmul.f32 %v268, %v293
    %v296 = vmul.f32 %v292, %v293
    %v298 = vsel %vm222, %v294, 0
    %v301 = vsel %vm222, %v295, 0
    %v304 = vsel %vm222, %v296, 0
    %v307 = vsel %vm222, %v244, 0
    %v310 = vsel %vm222, %v268, 0
    %v313 = vsel %vm222, %v292, 0
    %315 = vmatprep.subr.mxu0 0.0
    %316 = vmatpush1.xpose.msra.mxu0 0.0
    %317 = vmatprep.subr.mxu0 0.0
    %318 = vmatpush1.xpose.msra.mxu0 0.0
    %319 = vmatprep.subr.mxu0 0.0
    %320 = vmatpush1.xpose.msra.mxu0 0.0
    %321 = vmatprep.subr.mxu0 0.0
    %322 = vmatpush1.xpose.msra.mxu0 0.0
    %323 = vmatprep.subr.mxu0 0.0
    %324 = vmatpush1.xpose.msra.mxu0 0.0
    %325 = vmatprep.subr.mxu0 0.0
    %326 = vmatpush1.xpose.msra.mxu0 0.0
    %327 = vmatprep.subr.mxu0 0.0
    %328 = vmatpush1.xpose.msra.mxu0 0.0
    %329 = vmatprep.subr.mxu0 0.0
    %330 = vmatpush1.xpose.msra.mxu0 0.0
    %331 = vmatprep.subr.mxu0 0.0
    %332 = vmatpush1.xpose.msra.mxu0 0.0
    %333 = vmatprep.subr.mxu0 0.0
    %334 = vmatpush1.xpose.msra.mxu0 0.0
    %335 = vmatprep.subr.mxu0 0.0
    %336 = vmatpush1.xpose.msra.mxu0 0.0
    %337 = vmatprep.subr.mxu0 0.0
    %338 = vmatpush1.xpose.msra.mxu0 0.0
    %339 = vmatprep.subr.mxu0 0.0
    %340 = vmatpush1.xpose.msra.mxu0 0.0
    %341 = vmatprep.subr.mxu0 0.0
    %342 = vmatpush1.xpose.msra.mxu0 %v313
    %343 = vmatprep.subr.mxu0 0.0
    %344 = vmatpush1.xpose.msra.mxu0 %v310
    %345 = vmatprep.subr.mxu0 0.0
    %346 = vmatpush1.xpose.msra.mxu0 %v307
    %347 = vmatprep.subr.mxu0 0.0
    %348 = vmatpush2.xpose.msra.mxu0 0.0
    %349 = vmatprep.subr.mxu0 0.0
    %350 = vmatpush2.xpose.msra.mxu0 0.0
    %351 = vmatprep.subr.mxu0 0.0
    %352 = vmatpush2.xpose.msra.mxu0 0.0
    %353 = vmatprep.subr.mxu0 0.0
    %354 = vmatpush2.xpose.msra.mxu0 0.0
    %355 = vmatprep.subr.mxu0 0.0
    %356 = vmatpush2.xpose.msra.mxu0 0.0
    %357 = vmatprep.subr.mxu0 0.0
    %358 = vmatpush2.xpose.msra.mxu0 0.0
    %359 = vmatprep.subr.mxu0 0.0
    %360 = vmatpush2.xpose.msra.mxu0 0.0
    %361 = vmatprep.subr.mxu0 0.0
    %362 = vmatpush2.xpose.msra.mxu0 0.0
    %363 = vmatprep.subr.mxu0 0.0
    %364 = vmatpush2.xpose.msra.mxu0 0.0
    %365 = vmatprep.subr.mxu0 0.0
    %366 = vmatpush2.xpose.msra.mxu0 0.0
    %367 = vmatprep.subr.mxu0 0.0
    %368 = vmatpush2.xpose.msra.mxu0 0.0
    %369 = vmatprep.subr.mxu0 0.0
    %370 = vmatpush2.xpose.msra.mxu0 0.0
    %371 = vmatprep.subr.mxu0 0.0
    %372 = vmatpush2.xpose.msra.mxu0 0.0
    %373 = vmatprep.subr.mxu0 0.0
    %374 = vmatpush2.xpose.msra.mxu0 0.0
    %375 = vmatprep.subr.mxu0 0.0
    %376 = vmatpush2.xpose.msra.mxu0 0.0
    %377 = vmatprep.subr.mxu0 0.0
    %378 = vmatpush2.xpose.msra.mxu0 0.0
    %379 = vmatprep.mubr.f32.mxu0 0.0
    %380 = vmatmul.mubr.f32.gmra.mxu0 %v298
    %v381 = vpop.f32.mrf.mxu0
    %v382 = vadd.f32 0.0, %v381
    %v383 = vpop.f32.mrf.mxu0
    %384 = vmatprep.mubr.f32.mxu0 0.0
    %385 = vmatmul.mubr.f32.gmra.mxu0 %v301
    %v386 = vpop.f32.mrf.mxu0
    %v387 = vadd.f32 0.0, %v386
    %v388 = vpop.f32.mrf.mxu0
    %389 = vmatprep.mubr.f32.mxu0 0.0
    %390 = vmatmul.mubr.f32.gmra.mxu0 %v304
    %v391 = vpop.f32.mrf.mxu0
    %v392 = vadd.f32 0.0, %v391
    %v393 = vpop.f32.mrf.mxu0
    %394 = vdwg.mxu0
    %v395 = vlaneseq
    %v396 = vshrl.u32 %v395, 7
    %v397 = vadd.s32 %v396, 8
    %v398 = vadd.s32 %v396, 16
    %v399 = vlaneseq
    %v400 = vand.u32 %v399, 127
    %vm401 = vcmp.eq.s32.totalorder %v396, %v400
    %vm402 = vcmp.eq.s32.totalorder %v397, %v400
    %vm403 = vcmp.eq.s32.totalorder %v398, %v400
    %v404 = vsel %vm401, -1e+30, %v382
    %v405 = vsel %vm402, -1e+30, %v387
    %v406 = vsel %vm403, -1e+30, %v392
    %vm407 = vcmask 195584
    %v408 = vsel %vm407, %v404, -inf
    %409 = vmax.xlane.f32.xlu0 %v408
    %v410 = vpop.xlane.xlu0 %409
    %v411 = vsel %vm407, %v405, -inf
    %412 = vmax.xlane.f32.xlu0 %v411
    %v413 = vpop.xlane.xlu0 %412
    %v414 = vsel %vm407, %v406, -inf
    %415 = vmax.xlane.f32.xlu0 %v414
    %v416 = vpop.xlane.xlu0 %415
    %v417 = vsub.f32 %v404, %v410
    %v418 = vsub.f32 %v405, %v413
    %v419 = vsub.f32 %v406, %v416
    %v420 = vmul.f32 %v417, 1.442695
    %v421 = vpow.pop %v420
    %v422 = vmul.f32 %v418, 1.442695
    %v423 = vpow.pop %v422
    %v424 = vmul.f32 %v419, 1.442695
    %v425 = vpow.pop %v424
    %vm426 = vcmp.ge.s32.totalorder %v400, 0
    %vm427 = vcmp.lt.s32.totalorder %v400, 8
    %vm428 = vmand %vm426, %vm427
    %v429 = vsel %vm428, %v421, 0.0
    %v430 = vsel %vm428, %v423, 0.0
    %v431 = vsel %vm428, %v425, 0.0
    %v432 = vsel %vm407, %v429, 0.0
    %433 = vadd.xlane.f32.xlu0 %v432
    %v434 = vpop.xlane.xlu0 %433
    %v435 = vsel %vm407, %v430, 0.0
    %436 = vadd.xlane.f32.xlu0 %v435
    %v437 = vpop.xlane.xlu0 %436
    %v438 = vsel %vm407, %v431, 0.0
    %439 = vadd.xlane.f32.xlu0 %v438
    %v440 = vpop.xlane.xlu0 %439
    %vm441 = vcmp.ge.s32.totalorder %v400, 8
    %vm442 = vcmp.lt.s32.totalorder %v400, 16
    %vm443 = vmand %vm441, %vm442
    %v444 = vsel %vm443, %v421, 0.0
    %v445 = vsel %vm443, %v423, 0.0
    %v446 = vsel %vm443, %v425, 0.0
    %v447 = vsel %vm407, %v444, 0.0
    %448 = vadd.xlane.f32.xlu0 %v447
    %v449 = vpop.xlane.xlu0 %448
    %v450 = vsel %vm407, %v445, 0.0
    %451 = vadd.xlane.f32.xlu0 %v450
    %v452 = vpop.xlane.xlu0 %451
    %v453 = vsel %vm407, %v446, 0.0
    %454 = vadd.xlane.f32.xlu0 %v453
    %v455 = vpop.xlane.xlu0 %454
    %vm456 = vcmp.ge.s32.totalorder %v400, 16
    %vm457 = vcmp.lt.s32.totalorder %v400, 24
    %vm458 = vmand %vm456, %vm457
    %v459 = vsel %vm458, %v421, 0.0
    %v460 = vsel %vm458, %v423, 0.0
    %v461 = vsel %vm458, %v425, 0.0
    %v462 = vsel %vm407, %v459, 0.0
    %463 = vadd.xlane.f32.xlu0 %v462
    %v464 = vpop.xlane.xlu0 %463
    %v465 = vsel %vm407, %v460, 0.0
    %466 = vadd.xlane.f32.xlu0 %v465
    %v467 = vpop.xlane.xlu0 %466
    %v468 = vsel %vm407, %v461, 0.0
    %469 = vadd.xlane.f32.xlu0 %v468
    %v470 = vpop.xlane.xlu0 %469
    %vm471 = vcmp.ge.s32.totalorder %v396, 0
    %vm472 = vcmp.ge.s32.totalorder %v397, 0
    %vm473 = vcmp.ge.s32.totalorder %v398, 0
    %vm474 = vcmp.lt.s32.totalorder %v396, 8
    %vm475 = vcmp.lt.s32.totalorder %v397, 8
    %vm476 = vcmp.lt.s32.totalorder %v398, 8
    %vm477 = vmand %vm471, %vm474
    %vm478 = vmand %vm472, %vm475
    %vm479 = vmand %vm473, %vm476
    %vm480 = vcmp.ge.s32.totalorder %v396, 8
    %vm481 = vcmp.ge.s32.totalorder %v397, 8
    %vm482 = vcmp.ge.s32.totalorder %v398, 8
    %vm483 = vcmp.lt.s32.totalorder %v396, 16
    %vm484 = vcmp.lt.s32.totalorder %v397, 16
    %vm485 = vcmp.lt.s32.totalorder %v398, 16
    %vm486 = vmand %vm480, %vm483
    %vm487 = vmand %vm481, %vm484
    %vm488 = vmand %vm482, %vm485
    %vm489 = vcmp.ge.s32.totalorder %v396, 16
    %vm490 = vcmp.ge.s32.totalorder %v397, 16
    %vm491 = vcmp.ge.s32.totalorder %v398, 16
    %vm492 = vcmp.lt.s32.totalorder %v396, 24
    %vm493 = vcmp.lt.s32.totalorder %v397, 24
    %vm494 = vcmp.lt.s32.totalorder %v398, 24
    %vm495 = vmand %vm489, %vm492
    %vm496 = vmand %vm490, %vm493
    %vm497 = vmand %vm491, %vm494
    %v498 = vadd.f32 %v434, %v449
    %v499 = vadd.f32 %v437, %v452
    %v500 = vadd.f32 %v440, %v455
    %v501 = vlog2.pop %v498
    %v502 = vmul.f32 %v501, 0.6931472
    %v503 = vlog2.pop %v499
    %v504 = vmul.f32 %v503, 0.6931472
    %v505 = vlog2.pop %v500
    %v506 = vmul.f32 %v505, 0.6931472
    %v507 = vadd.f32 %v502, %v410
    %v508 = vadd.f32 %v504, %v413
    %v509 = vadd.f32 %v506, %v416
    %vm510 = vmor %vm477, %vm486
    %vm511 = vmor %vm478, %vm487
    %vm512 = vmor %vm479, %vm488
    %v513 = vsel %vm510, %v507, 0.0
    %v514 = vsel %vm511, %v508, 0.0
    %v515 = vsel %vm512, %v509, 0.0
    %vm516 = vcmask 7168
    %v517 = vsel %vm516, %v513, 0.0
    %v518 = vsel %vm516, %v514, 0.0
    %v519 = vadd.f32 %v517, %v518
    %v520 = vsel %vm516, %v515, 0.0
    %v521 = vadd.f32 %v519, %v520
    %522 = vadd.xlane.f32.xlu0 %v521
    %v523 = vpop.xlane.xlu0 %522
    %v524 = vrot.slane %v523, 4
    %v525 = vadd.f32 %v523, %v524
    %v526 = vrot.slane %v525, 2
    %v527 = vadd.f32 %v525, %v526
    %v528 = vrot.slane %v527, 1
    %v529 = vadd.f32 %v527, %v528
    %s530 = vtos %v529
    %v531 = vadd.f32 %v434, %v464
    %v532 = vadd.f32 %v437, %v467
    %v533 = vadd.f32 %v440, %v470
    %v534 = vlog2.pop %v531
    %v535 = vmul.f32 %v534, 0.6931472
    %v536 = vlog2.pop %v532
    %v537 = vmul.f32 %v536, 0.6931472
    %v538 = vlog2.pop %v533
    %v539 = vmul.f32 %v538, 0.6931472
    %v540 = vadd.f32 %v535, %v410
    %v541 = vadd.f32 %v537, %v413
    %v542 = vadd.f32 %v539, %v416
    %vm543 = vmor %vm477, %vm495
    %vm544 = vmor %vm478, %vm496
    %vm545 = vmor %vm479, %vm497
    %v546 = vsel %vm543, %v540, 0.0
    %v547 = vsel %vm544, %v541, 0.0
    %v548 = vsel %vm545, %v542, 0.0
    %v549 = vsel %vm516, %v546, 0.0
    %v550 = vsel %vm516, %v547, 0.0
    %v551 = vadd.f32 %v549, %v550
    %v552 = vsel %vm516, %v548, 0.0
    %v553 = vadd.f32 %v551, %v552
    %554 = vadd.xlane.f32.xlu0 %v553
    %v555 = vpop.xlane.xlu0 %554
    %v556 = vrot.slane %v555, 4
    %v557 = vadd.f32 %v555, %v556
    %v558 = vrot.slane %v557, 2
    %v559 = vadd.f32 %v557, %v558
    %v560 = vrot.slane %v559, 1
    %v561 = vadd.f32 %v559, %v560
    %s562 = vtos %v561
    %s563 = sadd.f32 %s530, %s562
    %v564 = vadd.f32 %v449, %v464
    %v565 = vadd.f32 %v452, %v467
    %v566 = vadd.f32 %v455, %v470
    %v567 = vlog2.pop %v564
    %v568 = vmul.f32 %v567, 0.6931472
    %v569 = vlog2.pop %v565
    %v570 = vmul.f32 %v569, 0.6931472
    %v571 = vlog2.pop %v566
    %v572 = vmul.f32 %v571, 0.6931472
    %v573 = vadd.f32 %v568, %v410
    %v574 = vadd.f32 %v570, %v413
    %v575 = vadd.f32 %v572, %v416
    %vm576 = vmor %vm486, %vm495
    %vm577 = vmor %vm487, %vm496
    %vm578 = vmor %vm488, %vm497
    %v579 = vsel %vm576, %v573, 0.0
    %v580 = vsel %vm577, %v574, 0.0
    %v581 = vsel %vm578, %v575, 0.0
    %v582 = vsel %vm516, %v579, 0.0
    %v583 = vsel %vm516, %v580, 0.0
    %v584 = vadd.f32 %v582, %v583
    %v585 = vsel %vm516, %v581, 0.0
    %v586 = vadd.f32 %v584, %v585
    %587 = vadd.xlane.f32.xlu0 %v586
    %v588 = vpop.xlane.xlu0 %587
    %v589 = vrot.slane %v588, 4
    %v590 = vadd.f32 %v588, %v589
    %v591 = vrot.slane %v590, 2
    %v592 = vadd.f32 %v590, %v591
    %v593 = vrot.slane %v592, 1
    %v594 = vadd.f32 %v592, %v593
    %s595 = vtos %v594
    %s596 = sadd.f32 %s563, %s595
    %v597 = vmul.f32 %v244, %v268
    %v598 = vsel %vm222, %v597, 0.0
    %599 = vadd.xlane.f32.xlu0 %v598
    %v600 = vpop.xlane.xlu0 %599
    %v601 = vrot.slane %v600, 4
    %v602 = vadd.f32 %v600, %v601
    %v603 = vrot.slane %v602, 2
    %v604 = vadd.f32 %v602, %v603
    %v605 = vrot.slane %v604, 1
    %v606 = vadd.f32 %v604, %v605
    %s607 = vtos %v606
    %v608 = vmul.f32 %v244, %v292
    %v609 = vsel %vm222, %v608, 0.0
    %610 = vadd.xlane.f32.xlu0 %v609
    %v611 = vpop.xlane.xlu0 %610
    %v612 = vrot.slane %v611, 4
    %v613 = vadd.f32 %v611, %v612
    %v614 = vrot.slane %v613, 2
    %v615 = vadd.f32 %v613, %v614
    %v616 = vrot.slane %v615, 1
    %v617 = vadd.f32 %v615, %v616
    %s618 = vtos %v617
    %s619 = sadd.f32 %s607, %s618
    %v620 = vmul.f32 %v268, %v292
    %v621 = vsel %vm222, %v620, 0.0
    %622 = vadd.xlane.f32.xlu0 %v621
    %v623 = vpop.xlane.xlu0 %622
    %v624 = vrot.slane %v623, 4
    %v625 = vadd.f32 %v623, %v624
    %v626 = vrot.slane %v625, 2
    %v627 = vadd.f32 %v625, %v626
    %v628 = vrot.slane %v627, 1
    %v629 = vadd.f32 %v627, %v628
    %s630 = vtos %v629
    %s631 = sadd.f32 %s619, %s630
    %s632 = smul.f32 %s220, %s631
    %s633 = smul.f32 %s632, 2.0
    %s634 = ssub.f32 %s596, %s633
    %v635 = vrcp.pop 16.0
    %s636 = vtos %v635
    %s637 = smul.f32 %s634, %s636
    %s638 = scalar_lea.vmem %s2, 16
    %v639 = vld [vmem:[%s638] sm:$0xff]
    %vm640 = vcmask 261120
    %v641 = vsel %vm640, %v639, 0.0
    %642 = vadd.xlane.f32.xlu0 %v641
    %v643 = vpop.xlane.xlu0 %642
    %v644 = vrot.slane %v643, 4
    %v645 = vadd.f32 %v643, %v644
    %v646 = vrot.slane %v645, 2
    %v647 = vadd.f32 %v645, %v646
    %v648 = vrot.slane %v647, 1
    %v649 = vadd.f32 %v647, %v648
    %s650 = vtos %v649
    %v651 = vrcp.pop 256.0
    %s652 = vtos %v651
    %s653 = smul.f32 %s650, %s652
    %v654 = vstv %s653
    %v655 = vsub.f32 %v639, %v654
    %v656 = vmul.f32 %v655, %v655
    %v657 = vsel %vm640, %v656, 0.0
    %658 = vadd.xlane.f32.xlu0 %v657
    %v659 = vpop.xlane.xlu0 %658
    %v660 = vmax.f32 %v659, 1e-24
    %v661 = vrsqrt.pop %v660
    %v662 = vmul.f32 %v655, %v661
    %v663 = vld [vmem:[%s2] sm:$0xff]
    %v664 = vsel %vm640, %v663, 0.0
    %665 = vadd.xlane.f32.xlu0 %v664
    %v666 = vpop.xlane.xlu0 %665
    %v667 = vrot.slane %v666, 4
    %v668 = vadd.f32 %v666, %v667
    %v669 = vrot.slane %v668, 2
    %v670 = vadd.f32 %v668, %v669
    %v671 = vrot.slane %v670, 1
    %v672 = vadd.f32 %v670, %v671
    %s673 = vtos %v672
    %v674 = vrcp.pop 256.0
    %s675 = vtos %v674
    %s676 = smul.f32 %s673, %s675
    %v677 = vstv %s676
    %v678 = vsub.f32 %v663, %v677
    %v679 = vmul.f32 %v678, %v678
    %v680 = vsel %vm640, %v679, 0.0
    %681 = vadd.xlane.f32.xlu0 %v680
    %v682 = vpop.xlane.xlu0 %681
    %v683 = vmax.f32 %v682, 1e-24
    %v684 = vrsqrt.pop %v683
    %v685 = vmul.f32 %v678, %v684
    %v686 = vsub.f32 %v685, %v662
    %s687 = scalar_lea.vmem %s2, 8
    %v688 = vld [vmem:[%s687] sm:$0xff]
    %v689 = vsel %vm640, %v688, 0.0
    %690 = vadd.xlane.f32.xlu0 %v689
    %v691 = vpop.xlane.xlu0 %690
    %v692 = vrot.slane %v691, 4
    %v693 = vadd.f32 %v691, %v692
    %v694 = vrot.slane %v693, 2
    %v695 = vadd.f32 %v693, %v694
    %v696 = vrot.slane %v695, 1
    %v697 = vadd.f32 %v695, %v696
    %s698 = vtos %v697
    %v699 = vrcp.pop 256.0
    %s700 = vtos %v699
    %s701 = smul.f32 %s698, %s700
    %v702 = vstv %s701
    %v703 = vsub.f32 %v688, %v702
    %v704 = vmul.f32 %v703, %v703
    %v705 = vsel %vm640, %v704, 0.0
    %706 = vadd.xlane.f32.xlu0 %v705
    %v707 = vpop.xlane.xlu0 %706
    %v708 = vmax.f32 %v707, 1e-24
    %v709 = vrsqrt.pop %v708
    %v710 = vmul.f32 %v703, %v709
    %v711 = vsub.f32 %v710, %v662
    %v712 = vmul.f32 %v686, %v686
    %v713 = vsel %vm640, %v712, 0.0
    %714 = vadd.xlane.f32.xlu0 %v713
    %v715 = vpop.xlane.xlu0 %714
    %v716 = vrot.slane %v715, 4
    %v717 = vadd.f32 %v715, %v716
    %v718 = vrot.slane %v717, 2
    %v719 = vadd.f32 %v717, %v718
    %v720 = vrot.slane %v719, 1
    %v721 = vadd.f32 %v719, %v720
    %s722 = vtos %v721
    %v723 = vstv %s722
    %v724 = vrsqrt.pop %v723
    %v725 = vmul.f32 %v723, %v724
    %vm726 = vcmp.eq.f32.partialorder %v723, inf
    %v727 = vsel %vm726, %v723, %v725
    %vm728 = vcmp.eq.f32.partialorder %v723, 0.0
    %v729 = vand.u32 %v723, 2147483648
    %v730 = vsel %vm728, %v729, %v727
    %s731 = vtos %v730
    %v732 = vmul.f32 %v711, %v711
    %v733 = vsel %vm640, %v732, 0.0
    %734 = vadd.xlane.f32.xlu0 %v733
    %v735 = vpop.xlane.xlu0 %734
    %v736 = vrot.slane %v735, 4
    %v737 = vadd.f32 %v735, %v736
    %v738 = vrot.slane %v737, 2
    %v739 = vadd.f32 %v737, %v738
    %v740 = vrot.slane %v739, 1
    %v741 = vadd.f32 %v739, %v740
    %s742 = vtos %v741
    %v743 = vstv %s742
    %v744 = vrsqrt.pop %v743
    %v745 = vmul.f32 %v743, %v744
    %vm746 = vcmp.eq.f32.partialorder %v743, inf
    %v747 = vsel %vm746, %v743, %v745
    %vm748 = vcmp.eq.f32.partialorder %v743, 0.0
    %v749 = vand.u32 %v743, 2147483648
    %v750 = vsel %vm748, %v749, %v747
    %s751 = vtos %v750
    %s752 = sadd.f32 %s731, %s751
    %s753 = sadd.f32 %s752, 0.0
    %s754 = scalar_lea.vmem %s3, 16
    %v755 = vld [vmem:[%s754] sm:$0xff]
    %vm756 = vcmask 392192
    %v757 = vsel %vm756, %v755, 0.0
    %758 = vadd.xlane.f32.xlu0 %v757
    %v759 = vpop.xlane.xlu0 %758
    %v760 = vrot.slane %v759, 4
    %v761 = vadd.f32 %v759, %v760
    %v762 = vrot.slane %v761, 2
    %v763 = vadd.f32 %v761, %v762
    %v764 = vrot.slane %v763, 1
    %v765 = vadd.f32 %v763, %v764
    %s766 = vtos %v765
    %v767 = vrcp.pop 384.0
    %s768 = vtos %v767
    %s769 = smul.f32 %s766, %s768
    %v770 = vstv %s769
    %v771 = vsub.f32 %v755, %v770
    %v772 = vmul.f32 %v771, %v771
    %v773 = vsel %vm756, %v772, 0.0
    %774 = vadd.xlane.f32.xlu0 %v773
    %v775 = vpop.xlane.xlu0 %774
    %v776 = vmax.f32 %v775, 1e-24
    %v777 = vrsqrt.pop %v776
    %v778 = vmul.f32 %v771, %v777
    %v779 = vld [vmem:[%s3] sm:$0xff]
    %v780 = vsel %vm756, %v779, 0.0
    %781 = vadd.xlane.f32.xlu0 %v780
    %v782 = vpop.xlane.xlu0 %781
    %v783 = vrot.slane %v782, 4
    %v784 = vadd.f32 %v782, %v783
    %v785 = vrot.slane %v784, 2
    %v786 = vadd.f32 %v784, %v785
    %v787 = vrot.slane %v786, 1
    %v788 = vadd.f32 %v786, %v787
    %s789 = vtos %v788
    %v790 = vrcp.pop 384.0
    %s791 = vtos %v790
    %s792 = smul.f32 %s789, %s791
    %v793 = vstv %s792
    %v794 = vsub.f32 %v779, %v793
    %v795 = vmul.f32 %v794, %v794
    %v796 = vsel %vm756, %v795, 0.0
    %797 = vadd.xlane.f32.xlu0 %v796
    %v798 = vpop.xlane.xlu0 %797
    %v799 = vmax.f32 %v798, 1e-24
    %v800 = vrsqrt.pop %v799
    %v801 = vmul.f32 %v794, %v800
    %v802 = vsub.f32 %v801, %v778
    %s803 = scalar_lea.vmem %s3, 8
    %v804 = vld [vmem:[%s803] sm:$0xff]
    %v805 = vsel %vm756, %v804, 0.0
    %806 = vadd.xlane.f32.xlu0 %v805
    %v807 = vpop.xlane.xlu0 %806
    %v808 = vrot.slane %v807, 4
    %v809 = vadd.f32 %v807, %v808
    %v810 = vrot.slane %v809, 2
    %v811 = vadd.f32 %v809, %v810
    %v812 = vrot.slane %v811, 1
    %v813 = vadd.f32 %v811, %v812
    %s814 = vtos %v813
    %v815 = vrcp.pop 384.0
    %s816 = vtos %v815
    %s817 = smul.f32 %s814, %s816
    %v818 = vstv %s817
    %v819 = vsub.f32 %v804, %v818
    %v820 = vmul.f32 %v819, %v819
    %v821 = vsel %vm756, %v820, 0.0
    %822 = vadd.xlane.f32.xlu0 %v821
    %v823 = vpop.xlane.xlu0 %822
    %v824 = vmax.f32 %v823, 1e-24
    %v825 = vrsqrt.pop %v824
    %v826 = vmul.f32 %v819, %v825
    %v827 = vsub.f32 %v826, %v778
    %v828 = vmul.f32 %v802, %v802
    %v829 = vsel %vm756, %v828, 0.0
    %830 = vadd.xlane.f32.xlu0 %v829
    %v831 = vpop.xlane.xlu0 %830
    %v832 = vrot.slane %v831, 4
    %v833 = vadd.f32 %v831, %v832
    %v834 = vrot.slane %v833, 2
    %v835 = vadd.f32 %v833, %v834
    %v836 = vrot.slane %v835, 1
    %v837 = vadd.f32 %v835, %v836
    %s838 = vtos %v837
    %v839 = vstv %s838
    %v840 = vrsqrt.pop %v839
    %v841 = vmul.f32 %v839, %v840
    %vm842 = vcmp.eq.f32.partialorder %v839, inf
    %v843 = vsel %vm842, %v839, %v841
    %vm844 = vcmp.eq.f32.partialorder %v839, 0.0
    %v845 = vand.u32 %v839, 2147483648
    %v846 = vsel %vm844, %v845, %v843
    %s847 = vtos %v846
    %v848 = vmul.f32 %v827, %v827
    %v849 = vsel %vm756, %v848, 0.0
    %850 = vadd.xlane.f32.xlu0 %v849
    %v851 = vpop.xlane.xlu0 %850
    %v852 = vrot.slane %v851, 4
    %v853 = vadd.f32 %v851, %v852
    %v854 = vrot.slane %v853, 2
    %v855 = vadd.f32 %v853, %v854
    %v856 = vrot.slane %v855, 1
    %v857 = vadd.f32 %v855, %v856
    %s858 = vtos %v857
    %v859 = vstv %s858
    %v860 = vrsqrt.pop %v859
    %v861 = vmul.f32 %v859, %v860
    %vm862 = vcmp.eq.f32.partialorder %v859, inf
    %v863 = vsel %vm862, %v859, %v861
    %vm864 = vcmp.eq.f32.partialorder %v859, 0.0
    %v865 = vand.u32 %v859, 2147483648
    %v866 = vsel %vm864, %v865, %v863
    %s867 = vtos %v866
    %s868 = sadd.f32 %s847, %s867
    %s869 = sadd.f32 %s753, %s868
    %s870 = scalar_lea.vmem %s4, 16
    %v871 = vld [vmem:[%s870] sm:$0xff]
    %vm872 = vcmask 523264
    %v873 = vsel %vm872, %v871, 0.0
    %874 = vadd.xlane.f32.xlu0 %v873
    %v875 = vpop.xlane.xlu0 %874
    %v876 = vrot.slane %v875, 4
    %v877 = vadd.f32 %v875, %v876
    %v878 = vrot.slane %v877, 2
    %v879 = vadd.f32 %v877, %v878
    %v880 = vrot.slane %v879, 1
    %v881 = vadd.f32 %v879, %v880
    %s882 = vtos %v881
    %v883 = vrcp.pop 512.0
    %s884 = vtos %v883
    %s885 = smul.f32 %s882, %s884
    %v886 = vstv %s885
    %v887 = vsub.f32 %v871, %v886
    %v888 = vmul.f32 %v887, %v887
    %v889 = vsel %vm872, %v888, 0.0
    %890 = vadd.xlane.f32.xlu0 %v889
    %v891 = vpop.xlane.xlu0 %890
    %v892 = vmax.f32 %v891, 1e-24
    %v893 = vrsqrt.pop %v892
    %v894 = vmul.f32 %v887, %v893
    %v895 = vld [vmem:[%s4] sm:$0xff]
    %v896 = vsel %vm872, %v895, 0.0
    %897 = vadd.xlane.f32.xlu0 %v896
    %v898 = vpop.xlane.xlu0 %897
    %v899 = vrot.slane %v898, 4
    %v900 = vadd.f32 %v898, %v899
    %v901 = vrot.slane %v900, 2
    %v902 = vadd.f32 %v900, %v901
    %v903 = vrot.slane %v902, 1
    %v904 = vadd.f32 %v902, %v903
    %s905 = vtos %v904
    %v906 = vrcp.pop 512.0
    %s907 = vtos %v906
    %s908 = smul.f32 %s905, %s907
    %v909 = vstv %s908
    %v910 = vsub.f32 %v895, %v909
    %v911 = vmul.f32 %v910, %v910
    %v912 = vsel %vm872, %v911, 0.0
    %913 = vadd.xlane.f32.xlu0 %v912
    %v914 = vpop.xlane.xlu0 %913
    %v915 = vmax.f32 %v914, 1e-24
    %v916 = vrsqrt.pop %v915
    %v917 = vmul.f32 %v910, %v916
    %v918 = vsub.f32 %v917, %v894
    %s919 = scalar_lea.vmem %s4, 8
    %v920 = vld [vmem:[%s919] sm:$0xff]
    %v921 = vsel %vm872, %v920, 0.0
    %922 = vadd.xlane.f32.xlu0 %v921
    %v923 = vpop.xlane.xlu0 %922
    %v924 = vrot.slane %v923, 4
    %v925 = vadd.f32 %v923, %v924
    %v926 = vrot.slane %v925, 2
    %v927 = vadd.f32 %v925, %v926
    %v928 = vrot.slane %v927, 1
    %v929 = vadd.f32 %v927, %v928
    %s930 = vtos %v929
    %v931 = vrcp.pop 512.0
    %s932 = vtos %v931
    %s933 = smul.f32 %s930, %s932
    %v934 = vstv %s933
    %v935 = vsub.f32 %v920, %v934
    %v936 = vmul.f32 %v935, %v935
    %v937 = vsel %vm872, %v936, 0.0
    %938 = vadd.xlane.f32.xlu0 %v937
    %v939 = vpop.xlane.xlu0 %938
    %v940 = vmax.f32 %v939, 1e-24
    %v941 = vrsqrt.pop %v940
    %v942 = vmul.f32 %v935, %v941
    %v943 = vsub.f32 %v942, %v894
    %v944 = vmul.f32 %v918, %v918
    %v945 = vsel %vm872, %v944, 0.0
    %946 = vadd.xlane.f32.xlu0 %v945
    %v947 = vpop.xlane.xlu0 %946
    %v948 = vrot.slane %v947, 4
    %v949 = vadd.f32 %v947, %v948
    %v950 = vrot.slane %v949, 2
    %v951 = vadd.f32 %v949, %v950
    %v952 = vrot.slane %v951, 1
    %v953 = vadd.f32 %v951, %v952
    %s954 = vtos %v953
    %v955 = vstv %s954
    %v956 = vrsqrt.pop %v955
    %v957 = vmul.f32 %v955, %v956
    %vm958 = vcmp.eq.f32.partialorder %v955, inf
    %v959 = vsel %vm958, %v955, %v957
    %vm960 = vcmp.eq.f32.partialorder %v955, 0.0
    %v961 = vand.u32 %v955, 2147483648
    %v962 = vsel %vm960, %v961, %v959
    %s963 = vtos %v962
    %v964 = vmul.f32 %v943, %v943
    %v965 = vsel %vm872, %v964, 0.0
    %966 = vadd.xlane.f32.xlu0 %v965
    %v967 = vpop.xlane.xlu0 %966
    %v968 = vrot.slane %v967, 4
    %v969 = vadd.f32 %v967, %v968
    %v970 = vrot.slane %v969, 2
    %v971 = vadd.f32 %v969, %v970
    %v972 = vrot.slane %v971, 1
    %v973 = vadd.f32 %v971, %v972
    %s974 = vtos %v973
    %v975 = vstv %s974
    %v976 = vrsqrt.pop %v975
    %v977 = vmul.f32 %v975, %v976
    %vm978 = vcmp.eq.f32.partialorder %v975, inf
    %v979 = vsel %vm978, %v975, %v977
    %vm980 = vcmp.eq.f32.partialorder %v975, 0.0
    %v981 = vand.u32 %v975, 2147483648
    %v982 = vsel %vm980, %v981, %v979
    %s983 = vtos %v982
    %s984 = sadd.f32 %s963, %s983
    %s985 = sadd.f32 %s869, %s984
    %v986 = vld [vmem:[%s5] sm:$0x7]
    %s987 = scalar_lea.vmem %s5, 4
    %v988 = vld [vmem:[%s987] sm:$0x7]
    %v989 = vadd.f32 %v988, 1.0
    %v990 = vmul.f32 %v986, %v986
    %v991 = vsub.f32 %v989, %v990
    %v992 = vmul.f32 %v988, 1.442695
    %v993 = vpow.pop %v992
    %v994 = vsub.f32 %v991, %v993
    %vm995 = vcmask 1042432
    %v996 = vsel %vm995, %v994, 0.0
    %997 = vadd.xlane.f32.xlu0 %v996
    %v998 = vpop.xlane.xlu0 %997
    %v999 = vrot.slane %v998, 4
    %v1000 = vadd.f32 %v998, %v999
    %v1001 = vrot.slane %v1000, 2
    %v1002 = vadd.f32 %v1000, %v1001
    %v1003 = vrot.slane %v1002, 1
    %v1004 = vadd.f32 %v1002, %v1003
    %s1005 = vtos %v1004
    %s1006 = smul.f32 %s1005, -0.5
    %s1007 = sadd.f32 %s216, %s637
    %s1008 = smul.f32 %s985, 0.7
    %s1009 = sadd.f32 %s1007, %s1008
    %s1010 = sadd.f32 %s1009, %s1006
    %s1011 = scalar_lea.smem [#allocation3], 0
    %1012 = sst [smem:[%s1011]] %s1010
    %s1013 = scalar_lea.smem [#allocation3], 1
    %1014 = sst [smem:[%s1013]] %s1006
    // Predicated region
    $region30: #{_loss_core.1} parent=1 // pred_check
      _
    $region31: #{_loss_core.1} parent=1 // pred_check_branch
      %1016 = sbr.rel (0) target = $region33
    $region32: #{_loss_core.1} parent=1 // pred_region
      %s1018 = ssub.s32 16, 16
      %1019 = vsyncadd [#allocation4], %s1018
      %s1021 = sshll.u32 %s7, 4
      %s1022 = int_to_ptr.vmem [resolvable:$true] %s1021
      %1024 = dma.smem_to_vmem [#allocation3], 16, %s1022, [#allocation4]
    $region33: #{_loss_core.1} parent=1 // pred_fallthru
      _
    // Predicated region
    $region34: #{_loss_core.1} parent=1 // pred_check
      _
    $region35: #{_loss_core.1} parent=1 // pred_check_branch
      %1026 = sbr.rel (0) target = $region37
    $region36: #{_loss_core.1} parent=1 // pred_region
      %1027 = dma.done [#allocation4], 16
    $region37: #{_loss_core.1} parent=1 // pred_fallthru
      _
    %1028 = sfence
    %1029 = vsyncpa [#allocation4], 1

</llo_original>
